<compile_context>
chip_gen: v7x
topology: tpu7x:2x2x1
jax: 0.10.0
libtpu: 0.0.40
codegen_flags: <defaults>
</compile_context>

<pallas_src>
import functools

import jax
import jax.numpy as jnp
import numpy as np
from jax.experimental import pallas as pl
from jax.experimental.pallas import tpu as pltpu

EPS = 1e-5  # PyTorch InstanceNorm2d default eps (affine=False, biased variance)


def _unet_up_kernel(x_ref, w_ref, rm_ref, o_ref, *, H, W, C_out):
    """One batch element per grid step.

    x_ref : (1, (H+3)*(W+2), C_in) bf16  zero-padded input, spatial flattened,
                                         channels-last.  Row r = m*(W+2)+p is
                                         padded pixel (m, p); pad = 1 top/left,
                                         1 right, 2 bottom (the extra bottom
                                         row keeps every tap slice in bounds;
                                         wrap-around reads only hit zero pad).
    w_ref : (4, C_in, 4*C_out)      bf16 fused ConvTranspose2d weight; tap
                                         t = dy*2+dx, output column
                                         (ry*2+rx)*C_out + co holds
                                         W_t[ci, co, 2+ry-2*dy, 2+rx-2*dx].
    rm_ref: (Mp, 4)                 f32  1.0 where (row, parity) is a real
                                         output pixel (stats mask only).
    o_ref : (1, Mp, 4*C_out)        f32  normalised + ReLU'd "virtual" output;
                                         Mp=(H+1)*(W+2); row (m,p), column
                                         (ry,rx,co) is output pixel
                                         (2m-1+ry, 2p-1+rx, co); the one-pixel
                                         virtual border is cropped by the
                                         wrapper.
    """
    W2 = W + 2
    Mp = (H + 1) * W2
    C4 = 4 * C_out

    # --- transposed conv: 4 accumulated MXU matmuls (bf16 x bf16 -> f32) ------
    acc = None
    for dy in range(2):
        for dx in range(2):
            s = dy * W2 + dx                                  # static offset
            lhs = x_ref[0, s:s + Mp, :]                       # (Mp, C_in) bf16
            part = jnp.dot(lhs, w_ref[dy * 2 + dx],
                           preferred_element_type=jnp.float32)
            acc = part if acc is None else acc + part

    # --- InstanceNorm2d statistics: one streaming masked pass, f32 ------------
    inv_count = 1.0 / float(4 * H * W)      # exactly OH*OW valid pixels/channel
    s1 = jnp.zeros((1, C_out), jnp.float32)
    s2 = jnp.zeros((1, C_out), jnp.float32)
    for k in range(4):                                        # parity classes
        blk = acc[:, k * C_out:(k + 1) * C_out]               # (Mp, C_out)
        m = rm_ref[:, k:k + 1]                                # (Mp, 1)
        bm = blk * m                                          # masked values
        s1 = s1 + jnp.sum(bm, axis=0, keepdims=True)
        s2 = s2 + jnp.sum(bm * blk, axis=0, keepdims=True)
    mean = s1 * inv_count
    var = s2 * inv_count - mean * mean
    inv = jax.lax.rsqrt(var + EPS)

    # Broadcast per-channel stats across the 4 parity groups and finish with a
    # single lane-dense (Mp, 4*C_out) store.
    scale = jnp.concatenate([inv, inv, inv, inv], axis=1)     # (1, 4*C_out)
    shift = jnp.concatenate([mean, mean, mean, mean], axis=1)
    o_ref[0] = jnp.maximum((acc - shift) * scale, 0.0).astype(o_ref.dtype)


def _fused_weight(weight_t):
    """(C_in, C_out, 4, 4) ConvTranspose2d weight -> (4, C_in, 4*C_out) bf16."""
    parts = []
    for dy in range(2):
        for dx in range(2):
            cols = []
            for ry in range(2):
                for rx in range(2):
                    cols.append(weight_t[:, :, 2 + ry - 2 * dy, 2 + rx - 2 * dx])
            parts.append(jnp.concatenate(cols, axis=1))       # (C_in, 4*C_out)
    return jnp.stack(parts, axis=0).astype(jnp.bfloat16)


def _row_mask(H, W):
    """(Mp, 4) f32: 1.0 where (flattened row, parity class) is a real pixel."""
    W2 = W + 2
    r = np.arange((H + 1) * W2)
    m_i, p_i = r // W2, r % W2
    cols = []
    for ry in range(2):
        for rx in range(2):
            ok = (p_i <= W)
            ok = ok & ~((m_i == 0) & (ry == 0)) & ~((m_i == H) & (ry == 1))
            ok = ok & ~((p_i == 0) & (rx == 0)) & ~((p_i == W) & (rx == 1))
            cols.append(ok.astype(np.float32))
    return jnp.asarray(np.stack(cols, axis=1))


def unet_up_forward(x, skip, weight_t):
    """x: (N, C_in, H, W), skip: (N, C_skip, 2H, 2W),
    weight_t: (C_in, C_out, 4, 4)  PyTorch ConvTranspose2d weight (bias=False)."""
    N, C_in, H, W = x.shape
    C_out = weight_t.shape[1]
    W2 = W + 2
    Mp = (H + 1) * W2
    C4 = 4 * C_out
    R = (H + 3) * W2

    # Channels-last, zero-pad (top/left 1, right 1, bottom 2), flatten spatial.
    x_nhwc = jnp.transpose(x, (0, 2, 3, 1))
    x_pad = jnp.pad(x_nhwc, ((0, 0), (1, 2), (1, 1), (0, 0)))
    x_flat = x_pad.reshape(N, R, C_in).astype(jnp.bfloat16)

    w_fused = _fused_weight(weight_t)          # (4, C_in, 4*C_out) bf16
    row_mask = _row_mask(H, W)                 # (Mp, 4) f32

    kernel = functools.partial(_unet_up_kernel, H=H, W=W, C_out=C_out)
    out = pl.pallas_call(
        kernel,
        out_shape=jax.ShapeDtypeStruct((N, Mp, C4), jnp.float32),
        grid_spec=pltpu.PrefetchScalarGridSpec(
            num_scalar_prefetch=0,
            grid=(N,),
            in_specs=[
                pl.BlockSpec((1, R, C_in), lambda n: (n, 0, 0)),
                pl.BlockSpec((4, C_in, C4), lambda n: (0, 0, 0)),
                pl.BlockSpec((Mp, 4), lambda n: (0, 0)),
            ],
            out_specs=pl.BlockSpec((1, Mp, C4), lambda n: (n, 0, 0)),
        ),
        compiler_params=pltpu.CompilerParams(
            dimension_semantics=("parallel",),
            vmem_limit_bytes=64 * 1024 * 1024,
        ),
    )(x_flat, w_fused, row_mask)

    # Scatter the 4 parity classes back onto the 2H x 2W grid, crop the
    # one-pixel virtual border, and concat with the skip connection.
    v = out.reshape(N, H + 1, W2, 2, 2, C_out)
    v = v.transpose(0, 1, 3, 2, 4, 5).reshape(N, 2 * (H + 1), 2 * W2, C_out)
    y = v[:, 1:2 * H + 1, 1:2 * W + 1, :].transpose(0, 3, 1, 2)   # -> NCHW
    return jnp.concatenate([y, skip.astype(y.dtype)], axis=1)


def unet_up_reference(x, skip, weight_t):
    """Pure-JAX/XLA reference of the PyTorch forward (for verification)."""
    w_conv = jnp.flip(weight_t, axis=(2, 3)).transpose(1, 0, 2, 3)
    y = jax.lax.conv_general_dilated(
        x, w_conv, window_strides=(1, 1), padding=((2, 2), (2, 2)),
        lhs_dilation=(2, 2), dimension_numbers=('NCHW', 'OIHW', 'NCHW'))
    mean = y.mean(axis=(2, 3), keepdims=True)
    var = ((y - mean) ** 2).mean(axis=(2, 3), keepdims=True)
    y = jnp.maximum((y - mean) * jax.lax.rsqrt(var + EPS), 0.0)
    return jnp.concatenate([y, skip], axis=1)


if __name__ == "__main__":
    key = jax.random.PRNGKey(0)
    k_x, k_s, k_w = jax.random.split(key, 3)

    N, C_in, H, W = 2, 4, 8, 8
    C_out, C_skip = 4, 4

    x = jax.random.normal(k_x, (N, C_in, H, W), jnp.float32)
    skip = jax.random.normal(k_s, (N, C_skip, 2 * H, 2 * W), jnp.float32)
    # Deterministic "weights" for ConvTranspose2d(in=4, out=4, k=4), bias=False.
    weight_t = 0.1 * jax.random.normal(k_w, (C_in, C_out, 4, 4), jnp.float32)

    out = jax.block_until_ready(unet_up_forward(x, skip, weight_t))
    assert out.shape == (N, C_out + C_skip, 2 * H, 2 * W), out.shape

    # Compare against an XLA reference evaluated on the same bf16-rounded
    # operands (the kernel feeds the MXU bf16 inputs with f32 accumulation).
    x_q = x.astype(jnp.bfloat16).astype(jnp.float32)
    w_q = weight_t.astype(jnp.bfloat16).astype(jnp.float32)
    ref = unet_up_reference(x_q, skip, w_q)
    assert jnp.allclose(out, ref, atol=1e-2, rtol=1e-2), \
        float(jnp.max(jnp.abs(out - ref)))

    print("KERNEL_OK")
</pallas_src>

<mosaic_0001>
module attributes {stable_mosaic.version = 11 : i64} {
  func.func @_unet_up_kernel(%arg0: i32, %arg1: memref<1x110x4xbf16, #tpu.memory_space<vmem>>, %arg2: memref<4x4x16xbf16, #tpu.memory_space<vmem>>, %arg3: memref<90x4xf32, #tpu.memory_space<vmem>>, %arg4: memref<1x90x16xf32, #tpu.memory_space<vmem>>) attributes {dimension_semantics = [#tpu.dimension_semantics<parallel>], iteration_bounds = array<i64: 2>, scalar_prefetch = 0 : i64, scratch_operands = 0 : i64, tpu.core_type = #tpu.core_type<tc>, window_params = [{transform_indices = @transform_0, window_bounds = array<i64: 1, 110, 4>}, {pipeline_mode = #tpu.pipeline_mode<synchronous>, transform_indices = @transform_1, window_bounds = array<i64: 4, 4, 16>}, {pipeline_mode = #tpu.pipeline_mode<synchronous>, transform_indices = @transform_2, window_bounds = array<i64: 90, 4>}, {transform_indices = @transform_3, window_bounds = array<i64: 1, 90, 16>}]} {
    %c0 = arith.constant 0 : index
    %c0_0 = arith.constant 0 : index
    %c0_1 = arith.constant 0 : index
    %0 = vector.load %arg1[%c0, %c0_0, %c0_1] : memref<1x110x4xbf16, #tpu.memory_space<vmem>>, vector<1x90x4xbf16>
    %1 = vector.shape_cast %0 : vector<1x90x4xbf16> to vector<90x4xbf16>
    %c0_2 = arith.constant 0 : index
    %c0_3 = arith.constant 0 : index
    %c0_4 = arith.constant 0 : index
    %2 = vector.load %arg2[%c0_2, %c0_3, %c0_4] : memref<4x4x16xbf16, #tpu.memory_space<vmem>>, vector<1x4x16xbf16>
    %3 = vector.shape_cast %2 : vector<1x4x16xbf16> to vector<4x16xbf16>
    %cst = arith.constant dense<0.000000e+00> : vector<90x16xf32>
    %4 = tpu.matmul %1, %3, %cst {dimension_numbers = #tpu.dot_dimension_numbers<[1], [0], [0], [1], [0, 0, 1, 1], [], []>} : vector<90x4xbf16>, vector<4x16xbf16>, vector<90x16xf32> -> vector<90x16xf32>
    %c0_5 = arith.constant 0 : index
    %c1 = arith.constant 1 : index
    %c0_6 = arith.constant 0 : index
    %5 = vector.load %arg1[%c0_5, %c1, %c0_6] : memref<1x110x4xbf16, #tpu.memory_space<vmem>>, vector<1x90x4xbf16>
    %6 = vector.shape_cast %5 : vector<1x90x4xbf16> to vector<90x4xbf16>
    %c1_7 = arith.constant 1 : index
    %c0_8 = arith.constant 0 : index
    %c0_9 = arith.constant 0 : index
    %7 = vector.load %arg2[%c1_7, %c0_8, %c0_9] : memref<4x4x16xbf16, #tpu.memory_space<vmem>>, vector<1x4x16xbf16>
    %8 = vector.shape_cast %7 : vector<1x4x16xbf16> to vector<4x16xbf16>
    %cst_10 = arith.constant dense<0.000000e+00> : vector<90x16xf32>
    %9 = tpu.matmul %6, %8, %cst_10 {dimension_numbers = #tpu.dot_dimension_numbers<[1], [0], [0], [1], [0, 0, 1, 1], [], []>} : vector<90x4xbf16>, vector<4x16xbf16>, vector<90x16xf32> -> vector<90x16xf32>
    %10 = arith.addf %4, %9 : vector<90x16xf32>
    %c0_11 = arith.constant 0 : index
    %c10 = arith.constant 10 : index
    %c0_12 = arith.constant 0 : index
    %11 = vector.load %arg1[%c0_11, %c10, %c0_12] : memref<1x110x4xbf16, #tpu.memory_space<vmem>>, vector<1x90x4xbf16>
    %12 = vector.shape_cast %11 : vector<1x90x4xbf16> to vector<90x4xbf16>
    %c2 = arith.constant 2 : index
    %c0_13 = arith.constant 0 : index
    %c0_14 = arith.constant 0 : index
    %13 = vector.load %arg2[%c2, %c0_13, %c0_14] : memref<4x4x16xbf16, #tpu.memory_space<vmem>>, vector<1x4x16xbf16>
    %14 = vector.shape_cast %13 : vector<1x4x16xbf16> to vector<4x16xbf16>
    %cst_15 = arith.constant dense<0.000000e+00> : vector<90x16xf32>
    %15 = tpu.matmul %12, %14, %cst_15 {dimension_numbers = #tpu.dot_dimension_numbers<[1], [0], [0], [1], [0, 0, 1, 1], [], []>} : vector<90x4xbf16>, vector<4x16xbf16>, vector<90x16xf32> -> vector<90x16xf32>
    %16 = arith.addf %10, %15 : vector<90x16xf32>
    %c0_16 = arith.constant 0 : index
    %c11 = arith.constant 11 : index
    %c0_17 = arith.constant 0 : index
    %17 = vector.load %arg1[%c0_16, %c11, %c0_17] : memref<1x110x4xbf16, #tpu.memory_space<vmem>>, vector<1x90x4xbf16>
    %18 = vector.shape_cast %17 : vector<1x90x4xbf16> to vector<90x4xbf16>
    %c3 = arith.constant 3 : index
    %c0_18 = arith.constant 0 : index
    %c0_19 = arith.constant 0 : index
    %19 = vector.load %arg2[%c3, %c0_18, %c0_19] : memref<4x4x16xbf16, #tpu.memory_space<vmem>>, vector<1x4x16xbf16>
    %20 = vector.shape_cast %19 : vector<1x4x16xbf16> to vector<4x16xbf16>
    %cst_20 = arith.constant dense<0.000000e+00> : vector<90x16xf32>
    %21 = tpu.matmul %18, %20, %cst_20 {dimension_numbers = #tpu.dot_dimension_numbers<[1], [0], [0], [1], [0, 0, 1, 1], [], []>} : vector<90x4xbf16>, vector<4x16xbf16>, vector<90x16xf32> -> vector<90x16xf32>
    %22 = arith.addf %16, %21 : vector<90x16xf32>
    %cst_21 = arith.constant 0.000000e+00 : f32
    %23 = vector.broadcast %cst_21 : f32 to vector<1x4xf32>
    %cst_22 = arith.constant 0.000000e+00 : f32
    %24 = vector.broadcast %cst_22 : f32 to vector<1x4xf32>
    %25 = vector.extract_strided_slice %22 {offsets = [0, 0], sizes = [90, 4], strides = [1, 1]} : vector<90x16xf32> to vector<90x4xf32>
    %c0_23 = arith.constant 0 : index
    %c0_24 = arith.constant 0 : index
    %26 = vector.load %arg3[%c0_23, %c0_24] : memref<90x4xf32, #tpu.memory_space<vmem>>, vector<90x1xf32>
    %27 = vector.broadcast %26 : vector<90x1xf32> to vector<90x4xf32>
    %28 = arith.mulf %25, %27 : vector<90x4xf32>
    %cst_25 = arith.constant dense<0.000000e+00> : vector<4xf32>
    %29 = vector.multi_reduction <add>, %28, %cst_25 [0] : vector<90x4xf32> to vector<4xf32>
    %30 = vector.shape_cast %29 : vector<4xf32> to vector<1x4xf32>
    %31 = arith.addf %23, %30 : vector<1x4xf32>
    %32 = arith.mulf %28, %25 : vector<90x4xf32>
    %cst_26 = arith.constant dense<0.000000e+00> : vector<4xf32>
    %33 = vector.multi_reduction <add>, %32, %cst_26 [0] : vector<90x4xf32> to vector<4xf32>
    %34 = vector.shape_cast %33 : vector<4xf32> to vector<1x4xf32>
    %35 = arith.addf %24, %34 : vector<1x4xf32>
    %36 = vector.extract_strided_slice %22 {offsets = [0, 4], sizes = [90, 4], strides = [1, 1]} : vector<90x16xf32> to vector<90x4xf32>
    %c0_27 = arith.constant 0 : index
    %c1_28 = arith.constant 1 : index
    %37 = vector.load %arg3[%c0_27, %c1_28] : memref<90x4xf32, #tpu.memory_space<vmem>>, vector<90x1xf32>
    %38 = vector.broadcast %37 : vector<90x1xf32> to vector<90x4xf32>
    %39 = arith.mulf %36, %38 : vector<90x4xf32>
    %cst_29 = arith.constant dense<0.000000e+00> : vector<4xf32>
    %40 = vector.multi_reduction <add>, %39, %cst_29 [0] : vector<90x4xf32> to vector<4xf32>
    %41 = vector.shape_cast %40 : vector<4xf32> to vector<1x4xf32>
    %42 = arith.addf %31, %41 : vector<1x4xf32>
    %43 = arith.mulf %39, %36 : vector<90x4xf32>
    %cst_30 = arith.constant dense<0.000000e+00> : vector<4xf32>
    %44 = vector.multi_reduction <add>, %43, %cst_30 [0] : vector<90x4xf32> to vector<4xf32>
    %45 = vector.shape_cast %44 : vector<4xf32> to vector<1x4xf32>
    %46 = arith.addf %35, %45 : vector<1x4xf32>
    %47 = vector.extract_strided_slice %22 {offsets = [0, 8], sizes = [90, 4], strides = [1, 1]} : vector<90x16xf32> to vector<90x4xf32>
    %c0_31 = arith.constant 0 : index
    %c2_32 = arith.constant 2 : index
    %48 = vector.load %arg3[%c0_31, %c2_32] : memref<90x4xf32, #tpu.memory_space<vmem>>, vector<90x1xf32>
    %49 = vector.broadcast %48 : vector<90x1xf32> to vector<90x4xf32>
    %50 = arith.mulf %47, %49 : vector<90x4xf32>
    %cst_33 = arith.constant dense<0.000000e+00> : vector<4xf32>
    %51 = vector.multi_reduction <add>, %50, %cst_33 [0] : vector<90x4xf32> to vector<4xf32>
    %52 = vector.shape_cast %51 : vector<4xf32> to vector<1x4xf32>
    %53 = arith.addf %42, %52 : vector<1x4xf32>
    %54 = arith.mulf %50, %47 : vector<90x4xf32>
    %cst_34 = arith.constant dense<0.000000e+00> : vector<4xf32>
    %55 = vector.multi_reduction <add>, %54, %cst_34 [0] : vector<90x4xf32> to vector<4xf32>
    %56 = vector.shape_cast %55 : vector<4xf32> to vector<1x4xf32>
    %57 = arith.addf %46, %56 : vector<1x4xf32>
    %58 = vector.extract_strided_slice %22 {offsets = [0, 12], sizes = [90, 4], strides = [1, 1]} : vector<90x16xf32> to vector<90x4xf32>
    %c0_35 = arith.constant 0 : index
    %c3_36 = arith.constant 3 : index
    %59 = vector.load %arg3[%c0_35, %c3_36] : memref<90x4xf32, #tpu.memory_space<vmem>>, vector<90x1xf32>
    %60 = vector.broadcast %59 : vector<90x1xf32> to vector<90x4xf32>
    %61 = arith.mulf %58, %60 : vector<90x4xf32>
    %cst_37 = arith.constant dense<0.000000e+00> : vector<4xf32>
    %62 = vector.multi_reduction <add>, %61, %cst_37 [0] : vector<90x4xf32> to vector<4xf32>
    %63 = vector.shape_cast %62 : vector<4xf32> to vector<1x4xf32>
    %64 = arith.addf %53, %63 : vector<1x4xf32>
    %65 = arith.mulf %61, %58 : vector<90x4xf32>
    %cst_38 = arith.constant dense<0.000000e+00> : vector<4xf32>
    %66 = vector.multi_reduction <add>, %65, %cst_38 [0] : vector<90x4xf32> to vector<4xf32>
    %67 = vector.shape_cast %66 : vector<4xf32> to vector<1x4xf32>
    %68 = arith.addf %57, %67 : vector<1x4xf32>
    %cst_39 = arith.constant 3.906250e-03 : f32
    %69 = vector.broadcast %cst_39 : f32 to vector<1x4xf32>
    %70 = arith.mulf %64, %69 : vector<1x4xf32>
    %cst_40 = arith.constant 3.906250e-03 : f32
    %71 = vector.broadcast %cst_40 : f32 to vector<1x4xf32>
    %72 = arith.mulf %68, %71 : vector<1x4xf32>
    %73 = arith.mulf %70, %70 : vector<1x4xf32>
    %74 = arith.subf %72, %73 : vector<1x4xf32>
    %cst_41 = arith.constant 9.99999974E-6 : f32
    %75 = vector.broadcast %cst_41 : f32 to vector<1x4xf32>
    %76 = arith.addf %74, %75 : vector<1x4xf32>
    %77 = math.rsqrt %76 : vector<1x4xf32>
    %78 = tpu.concatenate %77, %77, %77, %77 in 1 : vector<1x4xf32>, vector<1x4xf32>, vector<1x4xf32>, vector<1x4xf32> -> vector<1x16xf32>
    %79 = tpu.concatenate %70, %70, %70, %70 in 1 : vector<1x4xf32>, vector<1x4xf32>, vector<1x4xf32>, vector<1x4xf32> -> vector<1x16xf32>
    %80 = vector.broadcast %79 : vector<1x16xf32> to vector<90x16xf32>
    %81 = arith.subf %22, %80 : vector<90x16xf32>
    %82 = vector.broadcast %78 : vector<1x16xf32> to vector<90x16xf32>
    %83 = arith.mulf %81, %82 : vector<90x16xf32>
    %cst_42 = arith.constant 0.000000e+00 : f32
    %84 = vector.broadcast %cst_42 : f32 to vector<90x16xf32>
    %85 = arith.maximumf %83, %84 : vector<90x16xf32>
    %c0_43 = arith.constant 0 : index
    %c0_44 = arith.constant 0 : index
    %c0_45 = arith.constant 0 : index
    %86 = vector.load %arg4[%c0_43, %c0_44, %c0_45] : memref<1x90x16xf32, #tpu.memory_space<vmem>>, vector<1x90x16xf32>
    %87 = vector.shape_cast %86 : vector<1x90x16xf32> to vector<90x16xf32>
    %88 = vector.shape_cast %85 : vector<90x16xf32> to vector<1x90x16xf32>
    tpu.vector_store %arg4[%c0_43, %c0_44, %c0_45], %88 {strides = array<i32>} : memref<1x90x16xf32, #tpu.memory_space<vmem>>, vector<1x90x16xf32>,
    return
  }
  func.func @transform_0(%arg0: i32) -> (i32, i32, i32) {
    %c0_i32 = arith.constant 0 : i32
    %c0_i32_0 = arith.constant 0 : i32
    %c0_i32_1 = arith.constant 0 : i32
    return %arg0, %c0_i32, %c0_i32_0 : i32, i32, i32
  }
  func.func @transform_1(%arg0: i32) -> (i32, i32, i32) {
    %c0_i32 = arith.constant 0 : i32
    %c0_i32_0 = arith.constant 0 : i32
    %c0_i32_1 = arith.constant 0 : i32
    %c0_i32_2 = arith.constant 0 : i32
    return %c0_i32, %c0_i32_0, %c0_i32_1 : i32, i32, i32
  }
  func.func @transform_2(%arg0: i32) -> (i32, i32) {
    %c0_i32 = arith.constant 0 : i32
    %c0_i32_0 = arith.constant 0 : i32
    %c0_i32_1 = arith.constant 0 : i32
    return %c0_i32, %c0_i32_0 : i32, i32
  }
  func.func @transform_3(%arg0: i32) -> (i32, i32, i32) {
    %c0_i32 = arith.constant 0 : i32
    %c0_i32_0 = arith.constant 0 : i32
    %c0_i32_1 = arith.constant 0 : i32
    return %arg0, %c0_i32, %c0_i32_0 : i32, i32, i32
  }
}

</mosaic_0001>

<llo_original>
// kernel: tpu_custom_call.1
$region0: #{tpu_custom_call.1}
  #allocation0 [shape = 'u32[]', space=smem, size = 0x4, offset = 0x4, fixed_abs, tag = 'smem constant byte address 0x4 - core index']
  #allocation1 [shape = 'u32[144,128]{1,0:T(1,128)}', space=vmem, size = 0x12000, scoped, tag = 'internal scratch']
  %s0 = inlined_call_operand.hbm [shape: bf16[2,110,4], index: 0, kind: input, shape index: {}]
  %s1 = inlined_call_operand.hbm [shape: bf16[4,4,16], index: 1, kind: input, shape index: {}]
  %s2 = inlined_call_operand.hbm [shape: f32[90,4], index: 2, kind: input, shape index: {}]
  %s3 = inlined_call_operand.hbm [shape: f32[2,90,16], index: 3, kind: output, shape index: {}]
  %s4 = sld [smem:[#allocation0]]
  $region57: #{tpu_custom_call.1} parent=0
    _
  %s6 = ssub.s32 1, %s4
  %s7 = scalar_select 0, %s6, %s4
  $region1: #{tpu_custom_call.1} parent=0
    #allocation2 [shape = 'u8[57344]{0}', space=vmem, size = 0xe000, scoped, tag = 'input window, operand 0']
    #allocation3 [shape = 's32[2]{0}', space=sflag, size = 0x8, scoped, tag = 'scoped memory for tpu_custom_call.1']
    #allocation4 [shape = 's32[2]{0}', space=sflag, size = 0x8, scoped, tag = 'scoped memory for tpu_custom_call.1']
    #allocation5 [shape = 'u8[4096]{0}', space=vmem, size = 0x1000, scoped, tag = 'input window, operand 1, single buffered']
    #allocation6 [shape = 's32[1]{0}', space=sflag, size = 0x4, scoped, tag = 'scoped memory for tpu_custom_call.1']
    #allocation7 [shape = 'u8[49152]{0}', space=vmem, size = 0xc000, scoped, tag = 'input window, operand 2, single buffered']
    #allocation8 [shape = 'u8[98304]{0}', space=vmem, size = 0x18000, scoped, tag = 'output window, operand 0']
    %8 = vsyncpa [#allocation3], 0
    %s9 = scalar_lea.sflag [#allocation3], 1
    %10 = vsyncpa %s9, 0
    %11 = vsyncpa [#allocation6], 0
    %12 = vsyncpa [#allocation4], 0
    %s13 = scalar_lea.sflag [#allocation4], 1
    %14 = vsyncpa %s13, 0
    loop: start=0, step=1, limit=4
    $region2: #{tpu_custom_call.1} parent=1 // loop_pre_header
      _
    $region3: #{tpu_custom_call.1} parent=1 // loop_header
      %s16 = sphi 0, %s20
      %p17 = scmp.ge.s32.totalorder %s16, 4
      %s26 = sphi 0, %s28
      %s29 = sphi 0, %s26
      %s30 = sphi 0, %s29
      %s46 = sphi 0, %s30
      %s50 = sphi 0, %s50
      %s52 = sphi 0, %s50
      %s53 = sphi 0, %s52
      %s67 = sphi 0, %s53
      %s71 = sphi 0, %s71
      %s73 = sphi 0, %s71
      %s74 = sphi 0, %s73
      %s88 = sphi 0, %s74
      %s94 = sphi 0, %s96
      %s97 = sphi 0, %s94
      %s98 = sphi 0, %s97
      %s114 = sphi 0, %s98
    $region4: #{tpu_custom_call.1} parent=1 // loop_header_branch
      %19 = sbr.rel (%p17) target = $region8
    $region5: #{tpu_custom_call.1} parent=1 // loop_body
      %s21 = ssub.s32 %s16, 1
      %s22 = ssub.s32 %s16, 2
      %s23 = sadd.s32 %s16, 1
      %s24 = ssub.s32 %s16, %s23
      %p25 = scmp.eq.s32.totalorder %s24, 0
      %s27 = sadd.s32 %s26, 1
      %s28 = scalar_select %p25, %s26, %s27
      %p31 = pneg %p25
      %p32 = scmp.eq.s32.totalorder %s16, 1
      %p33 = por %p31, %p32
      %p34 = scmp.ne.s32.totalorder %s26, %s29
      %p35 = scmp.eq.s32.totalorder %s16, 0
      %p36 = por %p34, %p35
      %p37 = scmp.ne.s32.totalorder %s26, %s29
      %p38 = scmp.eq.s32.totalorder %s21, 1
      %p39 = por %p37, %p38
      %p40 = scmp.ne.s32.totalorder %s29, %s30
      %p41 = scmp.eq.s32.totalorder %s21, 0
      %p42 = por %p40, %p41
      %p43 = scmp.ne.s32.totalorder %s29, %s30
      %p44 = scmp.eq.s32.totalorder %s22, 1
      %p45 = por %p43, %p44
      %p47 = scmp.ne.s32.totalorder %s30, %s46
      %p48 = scmp.eq.s32.totalorder %s22, 0
      %p49 = por %p47, %p48
      %s51 = sadd.s32 %s50, 1
      %p54 = scmp.eq.s32.totalorder %s16, 1
      %p55 = scmp.ne.s32.totalorder %s50, %s52
      %p56 = scmp.eq.s32.totalorder %s16, 0
      %p57 = por %p55, %p56
      %p58 = scmp.ne.s32.totalorder %s50, %s52
      %p59 = scmp.eq.s32.totalorder %s21, 1
      %p60 = por %p58, %p59
      %p61 = scmp.ne.s32.totalorder %s52, %s53
      %p62 = scmp.eq.s32.totalorder %s21, 0
      %p63 = por %p61, %p62
      %p64 = scmp.ne.s32.totalorder %s52, %s53
      %p65 = scmp.eq.s32.totalorder %s22, 1
      %p66 = por %p64, %p65
      %p68 = scmp.ne.s32.totalorder %s53, %s67
      %p69 = scmp.eq.s32.totalorder %s22, 0
      %p70 = por %p68, %p69
      %s72 = sadd.s32 %s71, 1
      %p75 = scmp.eq.s32.totalorder %s16, 1
      %p76 = scmp.ne.s32.totalorder %s71, %s73
      %p77 = scmp.eq.s32.totalorder %s16, 0
      %p78 = por %p76, %p77
      %p79 = scmp.ne.s32.totalorder %s71, %s73
      %p80 = scmp.eq.s32.totalorder %s21, 1
      %p81 = por %p79, %p80
      %p82 = scmp.ne.s32.totalorder %s73, %s74
      %p83 = scmp.eq.s32.totalorder %s21, 0
      %p84 = por %p82, %p83
      %p85 = scmp.ne.s32.totalorder %s73, %s74
      %p86 = scmp.eq.s32.totalorder %s22, 1
      %p87 = por %p85, %p86
      %p89 = scmp.ne.s32.totalorder %s74, %s88
      %p90 = scmp.eq.s32.totalorder %s22, 0
      %p91 = por %p89, %p90
      %s92 = ssub.s32 %s16, %s23
      %p93 = scmp.eq.s32.totalorder %s92, 0
      %s95 = sadd.s32 %s94, 1
      %s96 = scalar_select %p93, %s94, %s95
      %p99 = pneg %p93
      %p100 = scmp.eq.s32.totalorder %s16, 1
      %p101 = por %p99, %p100
      %p102 = scmp.ne.s32.totalorder %s94, %s97
      %p103 = scmp.eq.s32.totalorder %s16, 0
      %p104 = por %p102, %p103
      %p105 = scmp.ne.s32.totalorder %s94, %s97
      %p106 = scmp.eq.s32.totalorder %s21, 1
      %p107 = por %p105, %p106
      %p108 = scmp.ne.s32.totalorder %s97, %s98
      %p109 = scmp.eq.s32.totalorder %s21, 0
      %p110 = por %p108, %p109
      %p111 = scmp.ne.s32.totalorder %s97, %s98
      %p112 = scmp.eq.s32.totalorder %s22, 1
      %p113 = por %p111, %p112
      %p115 = scmp.ne.s32.totalorder %s98, %s114
      %p116 = scmp.eq.s32.totalorder %s22, 0
      %p117 = por %p115, %p116
      %p118 = scmp.le.s32.totalorder 1, %s16
      %p119 = scmp.lt.s32.totalorder %s16, 3
      %p120 = pnand %p118, %p119
      %p121 = pneg %p120
      // Predicated region
      $region9: #{tpu_custom_call.1} parent=5 // pred_check
        _
      $region10: #{tpu_custom_call.1} parent=5 // pred_check_branch
        %123 = sbr.rel (%p120) target = $region12
      $region11: #{tpu_custom_call.1} parent=5 // pred_region
        %s124 = ssub.s32 %s16, 1
        // Predicated region
        $region13: #{tpu_custom_call.1} parent=11 // pred_check
          %p125 = pneg %p63
        $region14: #{tpu_custom_call.1} parent=11 // pred_check_branch
          %127 = sbr.rel (%p125) target = $region16
        $region15: #{tpu_custom_call.1} parent=11 // pred_region
          %s129 = ssub.s32 128, 128
          %130 = vsyncadd [#allocation6], %s129
          %s131 = sshll.u32 [#allocation5], 4
          %s132 = int_to_ptr.vmem [resolvable:$true] %s131
          %137 = dma.hbm_to_vmem [thread:$0]  %s1, 128, %s132, [#allocation6], 32, 32, 2
        $region16: #{tpu_custom_call.1} parent=11 // pred_fallthru
          _
        // Predicated region
        $region17: #{tpu_custom_call.1} parent=11 // pred_check
          %p138 = pneg %p84
        $region18: #{tpu_custom_call.1} parent=11 // pred_check_branch
          %140 = sbr.rel (%p138) target = $region20
        $region19: #{tpu_custom_call.1} parent=11 // pred_region
          %s142 = ssub.s32 1536, 1536
          %143 = vsyncadd [#allocation6], %s142
          %s144 = sshll.u32 [#allocation7], 4
          %s145 = int_to_ptr.vmem [resolvable:$true] %s144
          %150 = dma.hbm_to_vmem [thread:$0]  %s2, 1536, %s145, [#allocation6], 128, 128, 8
        $region20: #{tpu_custom_call.1} parent=11 // pred_fallthru
          _
      $region12: #{tpu_custom_call.1} parent=5 // pred_fallthru
        _
      %p151 = scmp.lt.s32.totalorder %s16, 2
      // Predicated region
      $region21: #{tpu_custom_call.1} parent=5 // pred_check
        %p152 = pneg %p151
      $region22: #{tpu_custom_call.1} parent=5 // pred_check_branch
        %154 = sbr.rel (%p152) target = $region24
      $region23: #{tpu_custom_call.1} parent=5 // pred_region
        // Predicated region
        $region25: #{tpu_custom_call.1} parent=23 // pred_check
          %p155 = pneg %p36
        $region26: #{tpu_custom_call.1} parent=23 // pred_check_branch
          %157 = sbr.rel (%p155) target = $region28
        $region27: #{tpu_custom_call.1} parent=23 // pred_region
          %s158 = sand.u32 %s26, 1
          %s159 = scalar_lea.sflag [#allocation3], %s158
          %s160 = sand.u32 %s26, 1
          %s161 = smul.addr %s160, 56
          %s162 = scalar_lea.vmem [#allocation2], %s161
          %s164 = ssub.s32 896, 896
          %165 = vsyncadd %s159, %s164
          %s166 = smul.addr %s16, 14
          %s167 = smul.addr %s166, 64
          %s168 = scalar_lea.hbm %s0, %s167
          %s169 = sshll.u32 %s162, 4
          %s170 = int_to_ptr.vmem [resolvable:$true] %s169
          %175 = dma.hbm_to_vmem [thread:$0]  %s168, 896, %s170, %s159, 64, 64, 4
        $region28: #{tpu_custom_call.1} parent=23 // pred_fallthru
          _
      $region24: #{tpu_custom_call.1} parent=5 // pred_fallthru
        _
      %p176 = scmp.le.s32.totalorder 1, %s16
      %p177 = scmp.lt.s32.totalorder %s16, 3
      %p178 = pnand %p176, %p177
      %p179 = pneg %p178
      // Predicated region
      $region29: #{tpu_custom_call.1} parent=5 // pred_check
        _
      $region30: #{tpu_custom_call.1} parent=5 // pred_check_branch
        %181 = sbr.rel (%p178) target = $region32
      $region31: #{tpu_custom_call.1} parent=5 // pred_region
        %s182 = ssub.s32 %s16, 1
        %s183 = sand.u32 %s29, 1
        %s184 = scalar_lea.sflag [#allocation3], %s183
        %s185 = sand.u32 %s29, 1
        %s186 = smul.addr %s185, 56
        %s187 = scalar_lea.vmem [#allocation2], %s186
        // Predicated region
        $region33: #{tpu_custom_call.1} parent=31 // pred_check
          %p188 = pneg %p42
        $region34: #{tpu_custom_call.1} parent=31 // pred_check_branch
          %190 = sbr.rel (%p188) target = $region36
        $region35: #{tpu_custom_call.1} parent=31 // pred_region
          %191 = dma.done %s184, 896
        $region36: #{tpu_custom_call.1} parent=31 // pred_fallthru
          _
        // Predicated region
        $region37: #{tpu_custom_call.1} parent=31 // pred_check
          %p192 = pneg %p63
        $region38: #{tpu_custom_call.1} parent=31 // pred_check_branch
          %194 = sbr.rel (%p192) target = $region40
        $region39: #{tpu_custom_call.1} parent=31 // pred_region
          %195 = dma.done [#allocation6], 128
        $region40: #{tpu_custom_call.1} parent=31 // pred_fallthru
          _
        // Predicated region
        $region41: #{tpu_custom_call.1} parent=31 // pred_check
          %p196 = pneg %p84
        $region42: #{tpu_custom_call.1} parent=31 // pred_check_branch
          %198 = sbr.rel (%p196) target = $region44
        $region43: #{tpu_custom_call.1} parent=31 // pred_region
          %199 = dma.done [#allocation6], 1536
        $region44: #{tpu_custom_call.1} parent=31 // pred_fallthru
          _
        %s200 = sand.u32 %s29, 1
        %s201 = scalar_lea.sflag [#allocation3], %s200
        %s202 = sand.u32 %s29, 1
        %s203 = smul.addr %s202, 56
        %s204 = scalar_lea.vmem [#allocation2], %s203
        %p205 = pneg %p42
        %p206 = pneg %p39
        %p207 = pneg %p63
        %p208 = pneg %p60
        %p209 = pneg %p84
        %p210 = pneg %p81
        %p211 = pneg %p110
        %p212 = pneg %p107
        %s213 = sand.u32 %s97, 1
        %s214 = scalar_lea.sflag [#allocation4], %s213
        %s215 = sand.u32 %s97, 1
        %s216 = smul.addr %s215, 96
        %s217 = scalar_lea.vmem [#allocation8], %s216
        %v219 = vld [vmem:[%s187] sm:$0xf]
        %v220 = vld [vmem:[%s187 + $0x4] sm:$0xf]
        %v221 = vld [vmem:[%s187 + $0x8] sm:$0xf]
        %v222 = vld [vmem:[%s187 + $0xc] sm:$0xf]
        %v223 = vld [vmem:[%s187 + $0x10] sm:$0xf]
        %v224 = vld [vmem:[%s187 + $0x14] sm:$0xf]
        %v225 = vld [vmem:[%s187 + $0x18] sm:$0xf]
        %v226 = vld [vmem:[%s187 + $0x1c] sm:$0xf]
        %v227 = vld [vmem:[%s187 + $0x20] sm:$0xf]
        %v228 = vld [vmem:[%s187 + $0x24] sm:$0xf]
        %v229 = vld [vmem:[%s187 + $0x28] sm:$0xf]
        %v230 = vld [vmem:[%s187 + $0x2c] sm:$0x1]
        %v231 = vld [vmem:[#allocation5] sm:$0x3]
        %v232 = vld [vmem:[%s187 + $0x2c] sm:$0x3]
        %s233 = scalar_lea.vmem [#allocation5], 2
        %v234 = vld [vmem:[%s233] sm:$0x3]
        %v247 = vunpack.c.l.b16 %v219
        %v248 = vunpack.c.l.b16 %v220
        %v249 = vunpack.c.l.b16 %v221
        %v250 = vunpack.c.l.b16 %v222
        %v251 = vunpack.c.l.b16 %v223
        %v252 = vunpack.c.l.b16 %v224
        %v253 = vunpack.c.l.b16 %v225
        %v254 = vunpack.c.l.b16 %v226
        %v255 = vunpack.c.l.b16 %v227
        %v256 = vunpack.c.l.b16 %v228
        %v257 = vunpack.c.l.b16 %v229
        %v258 = vunpack.c.l.b16 %v232
        %v259 = vpack.c.b16 %v248, %v247
        %v260 = vpack.c.b16 %v250, %v249
        %v261 = vpack.c.b16 %v252, %v251
        %v262 = vpack.c.b16 %v254, %v253
        %v263 = vpack.c.b16 %v256, %v255
        %v264 = vpack.c.b16 %v258, %v257
        %vm265 = vsmask.f32 7424
        %v267 = vshrl.u32 %v259, 16
        %v269 = vshll.u32 %v259, 16
        %v271 = vrot.slane %v269, 1
        %v272 = vor.u32 %v267, %v271
        %v274 = vshll.u32 %v260, 16
        %v276 = vrot.slane %v274, 1
        %v277 = vsel %vm265, %v272, %v276
        %v278 = vshrl.u32 %v260, 16
        %v280 = vor.u32 %v278, %v276
        %v282 = vshll.u32 %v261, 16
        %v284 = vrot.slane %v282, 1
        %v285 = vsel %vm265, %v280, %v284
        %v286 = vshrl.u32 %v261, 16
        %v288 = vor.u32 %v286, %v284
        %v290 = vshll.u32 %v262, 16
        %v292 = vrot.slane %v290, 1
        %v293 = vsel %vm265, %v288, %v292
        %v294 = vshrl.u32 %v262, 16
        %v296 = vor.u32 %v294, %v292
        %v298 = vshll.u32 %v263, 16
        %v300 = vrot.slane %v298, 1
        %v301 = vsel %vm265, %v296, %v300
        %v302 = vshrl.u32 %v263, 16
        %v304 = vor.u32 %v302, %v300
        %v306 = vshll.u32 %v264, 16
        %v308 = vrot.slane %v306, 1
        %v309 = vsel %vm265, %v304, %v308
        %v310 = vshrl.u32 %v264, 16
        %v312 = vor.u32 %v310, %v308
        %vm313 = vcmask 31744
        %v315 = vsel %vm313, %v277, 0
        %v318 = vsel %vm313, %v285, 0
        %v321 = vsel %vm313, %v293, 0
        %v324 = vsel %vm313, %v301, 0
        %v327 = vsel %vm313, %v309, 0
        %v330 = vsel %vm313, %v312, 0
        %vm332 = vcmask 1041408
        %v334 = vsel %vm332, %v234, 0
        %336 = vmatprep.subr.bf16.mxu0 0
        %337 = vmatpush1.bf16.msra.mxu0 %v334
        %338 = vmatprep.subr.bf16.mxu0 0
        %339 = vmatpush1.bf16.msra.mxu0 0
        %340 = vmatprep.subr.bf16.mxu0 0
        %341 = vmatpush1.bf16.msra.mxu0 0
        %342 = vmatprep.subr.bf16.mxu0 0
        %343 = vmatpush1.bf16.msra.mxu0 0
        %344 = vmatprep.subr.bf16.mxu0 0
        %345 = vmatpush1.bf16.msra.mxu0 0
        %346 = vmatprep.subr.bf16.mxu0 0
        %347 = vmatpush1.bf16.msra.mxu0 0
        %348 = vmatprep.subr.bf16.mxu0 0
        %349 = vmatpush1.bf16.msra.mxu0 0
        %350 = vmatprep.subr.bf16.mxu0 0
        %351 = vmatpush1.bf16.msra.mxu0 0
        %352 = vmatprep.subr.bf16.mxu0 0
        %353 = vmatpush1.bf16.msra.mxu0 0
        %354 = vmatprep.subr.bf16.mxu0 0
        %355 = vmatpush1.bf16.msra.mxu0 0
        %356 = vmatprep.subr.bf16.mxu0 0
        %357 = vmatpush1.bf16.msra.mxu0 0
        %358 = vmatprep.subr.bf16.mxu0 0
        %359 = vmatpush1.bf16.msra.mxu0 0
        %360 = vmatprep.subr.bf16.mxu0 0
        %361 = vmatpush1.bf16.msra.mxu0 0
        %362 = vmatprep.subr.bf16.mxu0 0
        %363 = vmatpush1.bf16.msra.mxu0 0
        %364 = vmatprep.subr.bf16.mxu0 0
        %365 = vmatpush1.bf16.msra.mxu0 0
        %366 = vmatprep.subr.bf16.mxu0 0
        %367 = vmatpush1.bf16.msra.mxu0 0
        %368 = vmatprep.mubr.bf16.mxu0 0
        %369 = vmatmul.mubr.bf16.gmra.mrb[0].mxu0 %v315
        %v370 = vpop.f32.mrb[0].mxu0
        %v371 = vadd.f32 0.0, %v370
        %v372 = vpop.f32.mrb[0].mxu0
        %v373 = vpop.f32.mrb[0].mxu0
        %v374 = vadd.f32 0.0, %v373
        %v375 = vpop.f32.mrb[0].mxu0
        %376 = vmatprep.mubr.bf16.mxu0 0
        %377 = vmatmul.mubr.bf16.gmra.mrb[0].mxu0 %v318
        %v378 = vpop.f32.mrb[0].mxu0
        %v379 = vadd.f32 0.0, %v378
        %v380 = vpop.f32.mrb[0].mxu0
        %v381 = vpop.f32.mrb[0].mxu0
        %v382 = vadd.f32 0.0, %v381
        %v383 = vpop.f32.mrb[0].mxu0
        %384 = vmatprep.mubr.bf16.mxu0 0
        %385 = vmatmul.mubr.bf16.gmra.mrb[0].mxu0 %v321
        %v386 = vpop.f32.mrb[0].mxu0
        %v387 = vadd.f32 0.0, %v386
        %v388 = vpop.f32.mrb[0].mxu0
        %v389 = vpop.f32.mrb[0].mxu0
        %v390 = vadd.f32 0.0, %v389
        %v391 = vpop.f32.mrb[0].mxu0
        %392 = vmatprep.mubr.bf16.mxu0 0
        %393 = vmatmul.mubr.bf16.gmra.mrb[0].mxu0 %v324
        %v394 = vpop.f32.mrb[0].mxu0
        %v395 = vadd.f32 0.0, %v394
        %v396 = vpop.f32.mrb[0].mxu0
        %v397 = vpop.f32.mrb[0].mxu0
        %v398 = vadd.f32 0.0, %v397
        %v399 = vpop.f32.mrb[0].mxu0
        %400 = vmatprep.mubr.bf16.mxu0 0
        %401 = vmatmul.mubr.bf16.gmra.mrb[0].mxu0 %v327
        %v402 = vpop.f32.mrb[0].mxu0
        %v403 = vadd.f32 0.0, %v402
        %v404 = vpop.f32.mrb[0].mxu0
        %v405 = vpop.f32.mrb[0].mxu0
        %v406 = vadd.f32 0.0, %v405
        %v407 = vpop.f32.mrb[0].mxu0
        %408 = vmatprep.mubr.bf16.mxu0 0
        %409 = vmatmul.mubr.bf16.gmra.mrb[0].mxu0 %v330
        %v410 = vpop.f32.mrb[0].mxu0
        %v411 = vadd.f32 0.0, %v410
        %v412 = vpop.f32.mrb[0].mxu0
        %v413 = vpop.f32.mrb[0].mxu0
        %v414 = vadd.f32 0.0, %v413
        %v415 = vpop.f32.mrb[0].mxu0
        %416 = vdwg.mxu0
        %v418 = vunpack.c.l.b16 %v230
        %v419 = vpack.c.b16 %v418, %v257
        %v420 = vsel %vm313, %v259, 0
        %v422 = vsel %vm313, %v260, 0
        %v424 = vsel %vm313, %v261, 0
        %v426 = vsel %vm313, %v262, 0
        %v428 = vsel %vm313, %v263, 0
        %v431 = vsel %vm313, %v419, 0
        %v434 = vsel %vm332, %v231, 0
        %436 = vmatprep.subr.bf16.mxu0 0
        %437 = vmatpush1.bf16.msra.mxu0 %v434
        %438 = vmatprep.subr.bf16.mxu0 0
        %439 = vmatpush1.bf16.msra.mxu0 0
        %440 = vmatprep.subr.bf16.mxu0 0
        %441 = vmatpush1.bf16.msra.mxu0 0
        %442 = vmatprep.subr.bf16.mxu0 0
        %443 = vmatpush1.bf16.msra.mxu0 0
        %444 = vmatprep.subr.bf16.mxu0 0
        %445 = vmatpush1.bf16.msra.mxu0 0
        %446 = vmatprep.subr.bf16.mxu0 0
        %447 = vmatpush1.bf16.msra.mxu0 0
        %448 = vmatprep.subr.bf16.mxu0 0
        %449 = vmatpush1.bf16.msra.mxu0 0
        %450 = vmatprep.subr.bf16.mxu0 0
        %451 = vmatpush1.bf16.msra.mxu0 0
        %452 = vmatprep.subr.bf16.mxu0 0
        %453 = vmatpush1.bf16.msra.mxu0 0
        %454 = vmatprep.subr.bf16.mxu0 0
        %455 = vmatpush1.bf16.msra.mxu0 0
        %456 = vmatprep.subr.bf16.mxu0 0
        %457 = vmatpush1.bf16.msra.mxu0 0
        %458 = vmatprep.subr.bf16.mxu0 0
        %459 = vmatpush1.bf16.msra.mxu0 0
        %460 = vmatprep.subr.bf16.mxu0 0
        %461 = vmatpush1.bf16.msra.mxu0 0
        %462 = vmatprep.subr.bf16.mxu0 0
        %463 = vmatpush1.bf16.msra.mxu0 0
        %464 = vmatprep.subr.bf16.mxu0 0
        %465 = vmatpush1.bf16.msra.mxu0 0
        %466 = vmatprep.subr.bf16.mxu0 0
        %467 = vmatpush1.bf16.msra.mxu0 0
        %468 = vmatprep.mubr.bf16.mxu0 0
        %469 = vmatmul.mubr.bf16.gmra.mrb[0].mxu0 %v420
        %v470 = vpop.f32.mrb[0].mxu0
        %v471 = vadd.f32 %v371, %v470
        %v472 = vpop.f32.mrb[0].mxu0
        %v473 = vpop.f32.mrb[0].mxu0
        %v474 = vadd.f32 %v374, %v473
        %v475 = vpop.f32.mrb[0].mxu0
        %476 = vmatprep.mubr.bf16.mxu0 0
        %477 = vmatmul.mubr.bf16.gmra.mrb[0].mxu0 %v422
        %v478 = vpop.f32.mrb[0].mxu0
        %v479 = vadd.f32 %v379, %v478
        %v480 = vpop.f32.mrb[0].mxu0
        %v481 = vpop.f32.mrb[0].mxu0
        %v482 = vadd.f32 %v382, %v481
        %v483 = vpop.f32.mrb[0].mxu0
        %484 = vmatprep.mubr.bf16.mxu0 0
        %485 = vmatmul.mubr.bf16.gmra.mrb[0].mxu0 %v424
        %v486 = vpop.f32.mrb[0].mxu0
        %v487 = vadd.f32 %v387, %v486
        %v488 = vpop.f32.mrb[0].mxu0
        %v489 = vpop.f32.mrb[0].mxu0
        %v490 = vadd.f32 %v390, %v489
        %v491 = vpop.f32.mrb[0].mxu0
        %492 = vmatprep.mubr.bf16.mxu0 0
        %493 = vmatmul.mubr.bf16.gmra.mrb[0].mxu0 %v426
        %v494 = vpop.f32.mrb[0].mxu0
        %v495 = vadd.f32 %v395, %v494
        %v496 = vpop.f32.mrb[0].mxu0
        %v497 = vpop.f32.mrb[0].mxu0
        %v498 = vadd.f32 %v398, %v497
        %v499 = vpop.f32.mrb[0].mxu0
        %500 = vmatprep.mubr.bf16.mxu0 0
        %501 = vmatmul.mubr.bf16.gmra.mrb[0].mxu0 %v428
        %v502 = vpop.f32.mrb[0].mxu0
        %v503 = vadd.f32 %v403, %v502
        %v504 = vpop.f32.mrb[0].mxu0
        %v505 = vpop.f32.mrb[0].mxu0
        %v506 = vadd.f32 %v406, %v505
        %v507 = vpop.f32.mrb[0].mxu0
        %508 = vmatprep.mubr.bf16.mxu0 0
        %509 = vmatmul.mubr.bf16.gmra.mrb[0].mxu0 %v431
        %v510 = vpop.f32.mrb[0].mxu0
        %v511 = vadd.f32 %v411, %v510
        %v512 = vpop.f32.mrb[0].mxu0
        %v513 = vpop.f32.mrb[0].mxu0
        %v514 = vadd.f32 %v414, %v513
        %v515 = vpop.f32.mrb[0].mxu0
        %516 = vdwg.mxu0
        %v517 = vld [vmem:[%s187 + $0x4] sm:$0xe]
        %v518 = vld [vmem:[%s187 + $0x8] sm:$0xf]
        %v519 = vld [vmem:[%s187 + $0xc] sm:$0xf]
        %v520 = vld [vmem:[%s187 + $0x10] sm:$0xf]
        %v521 = vld [vmem:[%s187 + $0x14] sm:$0xf]
        %v522 = vld [vmem:[%s187 + $0x18] sm:$0xf]
        %v523 = vld [vmem:[%s187 + $0x1c] sm:$0xf]
        %v524 = vld [vmem:[%s187 + $0x20] sm:$0xf]
        %v525 = vld [vmem:[%s187 + $0x24] sm:$0xf]
        %v526 = vld [vmem:[%s187 + $0x28] sm:$0xf]
        %v527 = vld [vmem:[%s187 + $0x2c] sm:$0xf]
        %v528 = vld [vmem:[%s187 + $0x30] sm:$0x3]
        %s529 = scalar_lea.vmem [#allocation5], 4
        %v530 = vld [vmem:[%s529] sm:$0x3]
        %v543 = vunpack.c.l.b16 %v517
        %v544 = vunpack.c.l.b16 %v518
        %v545 = vunpack.c.l.b16 %v519
        %v546 = vunpack.c.l.b16 %v520
        %v547 = vunpack.c.l.b16 %v521
        %v548 = vunpack.c.l.b16 %v522
        %v549 = vunpack.c.l.b16 %v523
        %v550 = vunpack.c.l.b16 %v524
        %v551 = vunpack.c.l.b16 %v525
        %v552 = vunpack.c.l.b16 %v526
        %v553 = vunpack.c.l.b16 %v527
        %v554 = vunpack.c.l.b16 %v528
        %v555 = vpack.c.b16 %v544, %v543
        %v556 = vpack.c.b16 %v546, %v545
        %v557 = vpack.c.b16 %v548, %v547
        %v558 = vpack.c.b16 %v550, %v549
        %v559 = vpack.c.b16 %v552, %v551
        %v560 = vpack.c.b16 %v554, %v553
        %vm561 = vcmask 1046528
        %v562 = vrot.slane %v555, 1
        %v563 = vrot.slane %v556, 1
        %v564 = vsel %vm561, %v562, %v563
        %v565 = vrot.slane %v557, 1
        %v566 = vsel %vm561, %v563, %v565
        %v567 = vrot.slane %v558, 1
        %v568 = vsel %vm561, %v565, %v567
        %v569 = vrot.slane %v559, 1
        %v570 = vsel %vm561, %v567, %v569
        %v571 = vrot.slane %v560, 1
        %v572 = vsel %vm561, %v569, %v571
        %v574 = vsel %vm313, %v564, 0
        %v577 = vsel %vm313, %v566, 0
        %v580 = vsel %vm313, %v568, 0
        %v583 = vsel %vm313, %v570, 0
        %v586 = vsel %vm313, %v572, 0
        %v589 = vsel %vm313, %v571, 0
        %v592 = vsel %vm332, %v530, 0
        %594 = vmatprep.subr.bf16.mxu0 0
        %595 = vmatpush1.bf16.msra.mxu0 %v592
        %596 = vmatprep.subr.bf16.mxu0 0
        %597 = vmatpush1.bf16.msra.mxu0 0
        %598 = vmatprep.subr.bf16.mxu0 0
        %599 = vmatpush1.bf16.msra.mxu0 0
        %600 = vmatprep.subr.bf16.mxu0 0
        %601 = vmatpush1.bf16.msra.mxu0 0
        %602 = vmatprep.subr.bf16.mxu0 0
        %603 = vmatpush1.bf16.msra.mxu0 0
        %604 = vmatprep.subr.bf16.mxu0 0
        %605 = vmatpush1.bf16.msra.mxu0 0
        %606 = vmatprep.subr.bf16.mxu0 0
        %607 = vmatpush1.bf16.msra.mxu0 0
        %608 = vmatprep.subr.bf16.mxu0 0
        %609 = vmatpush1.bf16.msra.mxu0 0
        %610 = vmatprep.subr.bf16.mxu0 0
        %611 = vmatpush1.bf16.msra.mxu0 0
        %612 = vmatprep.subr.bf16.mxu0 0
        %613 = vmatpush1.bf16.msra.mxu0 0
        %614 = vmatprep.subr.bf16.mxu0 0
        %615 = vmatpush1.bf16.msra.mxu0 0
        %616 = vmatprep.subr.bf16.mxu0 0
        %617 = vmatpush1.bf16.msra.mxu0 0
        %618 = vmatprep.subr.bf16.mxu0 0
        %619 = vmatpush1.bf16.msra.mxu0 0
        %620 = vmatprep.subr.bf16.mxu0 0
        %621 = vmatpush1.bf16.msra.mxu0 0
        %622 = vmatprep.subr.bf16.mxu0 0
        %623 = vmatpush1.bf16.msra.mxu0 0
        %624 = vmatprep.subr.bf16.mxu0 0
        %625 = vmatpush1.bf16.msra.mxu0 0
        %626 = vmatprep.mubr.bf16.mxu0 0
        %627 = vmatmul.mubr.bf16.gmra.mrb[0].mxu0 %v574
        %v628 = vpop.f32.mrb[0].mxu0
        %v629 = vadd.f32 0.0, %v628
        %v630 = vpop.f32.mrb[0].mxu0
        %v631 = vpop.f32.mrb[0].mxu0
        %v632 = vadd.f32 0.0, %v631
        %v633 = vpop.f32.mrb[0].mxu0
        %634 = vmatprep.mubr.bf16.mxu0 0
        %635 = vmatmul.mubr.bf16.gmra.mrb[0].mxu0 %v577
        %v636 = vpop.f32.mrb[0].mxu0
        %v637 = vadd.f32 0.0, %v636
        %v638 = vpop.f32.mrb[0].mxu0
        %v639 = vpop.f32.mrb[0].mxu0
        %v640 = vadd.f32 0.0, %v639
        %v641 = vpop.f32.mrb[0].mxu0
        %642 = vmatprep.mubr.bf16.mxu0 0
        %643 = vmatmul.mubr.bf16.gmra.mrb[0].mxu0 %v580
        %v644 = vpop.f32.mrb[0].mxu0
        %v645 = vadd.f32 0.0, %v644
        %v646 = vpop.f32.mrb[0].mxu0
        %v647 = vpop.f32.mrb[0].mxu0
        %v648 = vadd.f32 0.0, %v647
        %v649 = vpop.f32.mrb[0].mxu0
        %650 = vmatprep.mubr.bf16.mxu0 0
        %651 = vmatmul.mubr.bf16.gmra.mrb[0].mxu0 %v583
        %v652 = vpop.f32.mrb[0].mxu0
        %v653 = vadd.f32 0.0, %v652
        %v654 = vpop.f32.mrb[0].mxu0
        %v655 = vpop.f32.mrb[0].mxu0
        %v656 = vadd.f32 0.0, %v655
        %v657 = vpop.f32.mrb[0].mxu0
        %658 = vmatprep.mubr.bf16.mxu0 0
        %659 = vmatmul.mubr.bf16.gmra.mrb[0].mxu0 %v586
        %v660 = vpop.f32.mrb[0].mxu0
        %v661 = vadd.f32 0.0, %v660
        %v662 = vpop.f32.mrb[0].mxu0
        %v663 = vpop.f32.mrb[0].mxu0
        %v664 = vadd.f32 0.0, %v663
        %v665 = vpop.f32.mrb[0].mxu0
        %666 = vmatprep.mubr.bf16.mxu0 0
        %667 = vmatmul.mubr.bf16.gmra.mrb[0].mxu0 %v589
        %v668 = vpop.f32.mrb[0].mxu0
        %v669 = vadd.f32 0.0, %v668
        %v670 = vpop.f32.mrb[0].mxu0
        %v671 = vpop.f32.mrb[0].mxu0
        %v672 = vadd.f32 0.0, %v671
        %v673 = vpop.f32.mrb[0].mxu0
        %674 = vdwg.mxu0
        %v675 = vadd.f32 %v471, %v629
        %v676 = vadd.f32 %v474, %v632
        %v677 = vadd.f32 %v479, %v637
        %v678 = vadd.f32 %v482, %v640
        %v679 = vadd.f32 %v487, %v645
        %v680 = vadd.f32 %v490, %v648
        %v681 = vadd.f32 %v495, %v653
        %v682 = vadd.f32 %v498, %v656
        %v683 = vadd.f32 %v503, %v661
        %v684 = vadd.f32 %v506, %v664
        %v685 = vadd.f32 %v511, %v669
        %v686 = vadd.f32 %v514, %v672
        %v687 = vld [vmem:[%s187 + $0x30] sm:$0x7]
        %s688 = scalar_lea.vmem [#allocation5], 6
        %v689 = vld [vmem:[%s688] sm:$0x3]
        %v691 = vunpack.c.l.b16 %v687
        %v692 = vpack.c.b16 %v691, %v553
        %vm693 = vsmask.f32 6400
        %v695 = vshrl.u32 %v555, 16
        %v697 = vrot.slane %v695, 1
        %v698 = vshll.u32 %v555, 16
        %v700 = vrot.slane %v698, 2
        %v701 = vor.u32 %v697, %v700
        %v703 = vshrl.u32 %v556, 16
        %v705 = vrot.slane %v703, 1
        %v706 = vshll.u32 %v556, 16
        %v708 = vrot.slane %v706, 2
        %v709 = vor.u32 %v705, %v708
        %v710 = vsel %vm693, %v701, %v709
        %v712 = vshrl.u32 %v557, 16
        %v714 = vrot.slane %v712, 1
        %v715 = vshll.u32 %v557, 16
        %v717 = vrot.slane %v715, 2
        %v718 = vor.u32 %v714, %v717
        %v719 = vsel %vm693, %v709, %v718
        %v721 = vshrl.u32 %v558, 16
        %v723 = vrot.slane %v721, 1
        %v724 = vshll.u32 %v558, 16
        %v726 = vrot.slane %v724, 2
        %v727 = vor.u32 %v723, %v726
        %v728 = vsel %vm693, %v718, %v727
        %v730 = vshrl.u32 %v559, 16
        %v732 = vrot.slane %v730, 1
        %v733 = vshll.u32 %v559, 16
        %v735 = vrot.slane %v733, 2
        %v736 = vor.u32 %v732, %v735
        %v737 = vsel %vm693, %v727, %v736
        %v739 = vshrl.u32 %v692, 16
        %v741 = vrot.slane %v739, 1
        %v742 = vshll.u32 %v692, 16
        %v744 = vrot.slane %v742, 2
        %v745 = vor.u32 %v741, %v744
        %v746 = vsel %vm693, %v736, %v745
        %v748 = vsel %vm313, %v710, 0
        %v751 = vsel %vm313, %v719, 0
        %v754 = vsel %vm313, %v728, 0
        %v757 = vsel %vm313, %v737, 0
        %v760 = vsel %vm313, %v746, 0
        %v763 = vsel %vm313, %v745, 0
        %v766 = vsel %vm332, %v689, 0
        %768 = vmatprep.subr.bf16.mxu0 0
        %769 = vmatpush1.bf16.msra.mxu0 %v766
        %770 = vmatprep.subr.bf16.mxu0 0
        %771 = vmatpush1.bf16.msra.mxu0 0
        %772 = vmatprep.subr.bf16.mxu0 0
        %773 = vmatpush1.bf16.msra.mxu0 0
        %774 = vmatprep.subr.bf16.mxu0 0
        %775 = vmatpush1.bf16.msra.mxu0 0
        %776 = vmatprep.subr.bf16.mxu0 0
        %777 = vmatpush1.bf16.msra.mxu0 0
        %778 = vmatprep.subr.bf16.mxu0 0
        %779 = vmatpush1.bf16.msra.mxu0 0
        %780 = vmatprep.subr.bf16.mxu0 0
        %781 = vmatpush1.bf16.msra.mxu0 0
        %782 = vmatprep.subr.bf16.mxu0 0
        %783 = vmatpush1.bf16.msra.mxu0 0
        %784 = vmatprep.subr.bf16.mxu0 0
        %785 = vmatpush1.bf16.msra.mxu0 0
        %786 = vmatprep.subr.bf16.mxu0 0
        %787 = vmatpush1.bf16.msra.mxu0 0
        %788 = vmatprep.subr.bf16.mxu0 0
        %789 = vmatpush1.bf16.msra.mxu0 0
        %790 = vmatprep.subr.bf16.mxu0 0
        %791 = vmatpush1.bf16.msra.mxu0 0
        %792 = vmatprep.subr.bf16.mxu0 0
        %793 = vmatpush1.bf16.msra.mxu0 0
        %794 = vmatprep.subr.bf16.mxu0 0
        %795 = vmatpush1.bf16.msra.mxu0 0
        %796 = vmatprep.subr.bf16.mxu0 0
        %797 = vmatpush1.bf16.msra.mxu0 0
        %798 = vmatprep.subr.bf16.mxu0 0
        %799 = vmatpush1.bf16.msra.mxu0 0
        %800 = vmatprep.mubr.bf16.mxu0 0
        %801 = vmatmul.mubr.bf16.gmra.mrb[0].mxu0 %v748
        %v802 = vpop.f32.mrb[0].mxu0
        %v803 = vadd.f32 0.0, %v802
        %v804 = vpop.f32.mrb[0].mxu0
        %v805 = vpop.f32.mrb[0].mxu0
        %v806 = vadd.f32 0.0, %v805
        %v807 = vpop.f32.mrb[0].mxu0
        %808 = vmatprep.mubr.bf16.mxu0 0
        %809 = vmatmul.mubr.bf16.gmra.mrb[0].mxu0 %v751
        %v810 = vpop.f32.mrb[0].mxu0
        %v811 = vadd.f32 0.0, %v810
        %v812 = vpop.f32.mrb[0].mxu0
        %v813 = vpop.f32.mrb[0].mxu0
        %v814 = vadd.f32 0.0, %v813
        %v815 = vpop.f32.mrb[0].mxu0
        %816 = vmatprep.mubr.bf16.mxu0 0
        %817 = vmatmul.mubr.bf16.gmra.mrb[0].mxu0 %v754
        %v818 = vpop.f32.mrb[0].mxu0
        %v819 = vadd.f32 0.0, %v818
        %v820 = vpop.f32.mrb[0].mxu0
        %v821 = vpop.f32.mrb[0].mxu0
        %v822 = vadd.f32 0.0, %v821
        %v823 = vpop.f32.mrb[0].mxu0
        %824 = vmatprep.mubr.bf16.mxu0 0
        %825 = vmatmul.mubr.bf16.gmra.mrb[0].mxu0 %v757
        %v826 = vpop.f32.mrb[0].mxu0
        %v827 = vadd.f32 0.0, %v826
        %v828 = vpop.f32.mrb[0].mxu0
        %v829 = vpop.f32.mrb[0].mxu0
        %v830 = vadd.f32 0.0, %v829
        %v831 = vpop.f32.mrb[0].mxu0
        %832 = vmatprep.mubr.bf16.mxu0 0
        %833 = vmatmul.mubr.bf16.gmra.mrb[0].mxu0 %v760
        %v834 = vpop.f32.mrb[0].mxu0
        %v835 = vadd.f32 0.0, %v834
        %v836 = vpop.f32.mrb[0].mxu0
        %v837 = vpop.f32.mrb[0].mxu0
        %v838 = vadd.f32 0.0, %v837
        %v839 = vpop.f32.mrb[0].mxu0
        %840 = vmatprep.mubr.bf16.mxu0 0
        %841 = vmatmul.mubr.bf16.gmra.mrb[0].mxu0 %v763
        %v842 = vpop.f32.mrb[0].mxu0
        %v843 = vadd.f32 0.0, %v842
        %v844 = vpop.f32.mrb[0].mxu0
        %v845 = vpop.f32.mrb[0].mxu0
        %v846 = vadd.f32 0.0, %v845
        %v847 = vpop.f32.mrb[0].mxu0
        %848 = vdwg.mxu0
        %v849 = vadd.f32 %v675, %v803
        %v850 = vadd.f32 %v676, %v806
        %v851 = vadd.f32 %v677, %v811
        %v852 = vadd.f32 %v678, %v814
        %v853 = vadd.f32 %v679, %v819
        %v854 = vadd.f32 %v680, %v822
        %v855 = vadd.f32 %v681, %v827
        %v856 = vadd.f32 %v682, %v830
        %v857 = vadd.f32 %v683, %v835
        %v858 = vadd.f32 %v684, %v838
        %v859 = vadd.f32 %v685, %v843
        %v860 = vadd.f32 %v686, %v846
        %v861 = vld [vmem:[#allocation7] sm:$0xff]
        %v862 = vld [vmem:[#allocation7 + $0x8] sm:$0xff]
        %v863 = vld [vmem:[#allocation7 + $0x10] sm:$0xff]
        %v864 = vld [vmem:[#allocation7 + $0x18] sm:$0xff]
        %v865 = vld [vmem:[#allocation7 + $0x20] sm:$0xff]
        %v866 = vld [vmem:[#allocation7 + $0x28] sm:$0xff]
        %v867 = vld [vmem:[#allocation7 + $0x30] sm:$0xff]
        %v868 = vld [vmem:[#allocation7 + $0x38] sm:$0xff]
        %v869 = vld [vmem:[#allocation7 + $0x40] sm:$0xff]
        %v870 = vld [vmem:[#allocation7 + $0x48] sm:$0xff]
        %v871 = vld [vmem:[#allocation7 + $0x50] sm:$0xff]
        %v872 = vld [vmem:[#allocation7 + $0x58] sm:$0x3]
        %874 = vset.pattern.permute.xlu0 0
        %875 = vperm.xlu0 %874, %v861
        %v876 = vpop.permute.xlu0 %875
        %879 = vset.pattern.permute.xlu0 0
        %880 = vperm.xlu0 %879, %v862
        %v881 = vpop.permute.xlu0 %880
        %884 = vset.pattern.permute.xlu0 0
        %885 = vperm.xlu0 %884, %v863
        %v886 = vpop.permute.xlu0 %885
        %889 = vset.pattern.permute.xlu0 0
        %890 = vperm.xlu0 %889, %v864
        %v891 = vpop.permute.xlu0 %890
        %894 = vset.pattern.permute.xlu0 0
        %895 = vperm.xlu0 %894, %v865
        %v896 = vpop.permute.xlu0 %895
        %899 = vset.pattern.permute.xlu0 0
        %900 = vperm.xlu0 %899, %v866
        %v901 = vpop.permute.xlu0 %900
        %904 = vset.pattern.permute.xlu0 0
        %905 = vperm.xlu0 %904, %v867
        %v906 = vpop.permute.xlu0 %905
        %909 = vset.pattern.permute.xlu0 0
        %910 = vperm.xlu0 %909, %v868
        %v911 = vpop.permute.xlu0 %910
        %914 = vset.pattern.permute.xlu0 0
        %915 = vperm.xlu0 %914, %v869
        %v916 = vpop.permute.xlu0 %915
        %919 = vset.pattern.permute.xlu0 0
        %920 = vperm.xlu0 %919, %v870
        %v921 = vpop.permute.xlu0 %920
        %924 = vset.pattern.permute.xlu0 0
        %925 = vperm.xlu0 %924, %v871
        %v926 = vpop.permute.xlu0 %925
        %929 = vset.pattern.permute.xlu0 0
        %930 = vperm.xlu0 %929, %v872
        %v931 = vpop.permute.xlu0 %930
        %v933 = vmul.f32 %v849, %v876
        %v934 = vmul.f32 %v850, %v881
        %v935 = vmul.f32 %v851, %v886
        %v936 = vmul.f32 %v852, %v891
        %v937 = vmul.f32 %v853, %v896
        %v938 = vmul.f32 %v854, %v901
        %v939 = vmul.f32 %v855, %v906
        %v940 = vmul.f32 %v856, %v911
        %v941 = vmul.f32 %v857, %v916
        %v942 = vmul.f32 %v858, %v921
        %v943 = vmul.f32 %v859, %v926
        %v944 = vmul.f32 %v860, %v931
        %v945 = vsel %vm313, %v933, 0.0
        %v946 = vsel %vm313, %v934, 0.0
        %v947 = vadd.f32 %v945, %v946
        %v948 = vsel %vm313, %v935, 0.0
        %v949 = vadd.f32 %v947, %v948
        %v950 = vsel %vm313, %v936, 0.0
        %v951 = vadd.f32 %v949, %v950
        %v952 = vsel %vm313, %v937, 0.0
        %v953 = vadd.f32 %v951, %v952
        %v954 = vsel %vm313, %v938, 0.0
        %v955 = vadd.f32 %v953, %v954
        %v956 = vsel %vm313, %v939, 0.0
        %v957 = vadd.f32 %v955, %v956
        %v958 = vsel %vm313, %v940, 0.0
        %v959 = vadd.f32 %v957, %v958
        %v960 = vsel %vm313, %v941, 0.0
        %v961 = vadd.f32 %v959, %v960
        %v962 = vsel %vm313, %v942, 0.0
        %v963 = vadd.f32 %v961, %v962
        %v964 = vsel %vm313, %v943, 0.0
        %v965 = vadd.f32 %v963, %v964
        %vm966 = vcmask 25600
        %v967 = vsel %vm966, %v944, 0.0
        %v968 = vadd.f32 %v965, %v967
        %v969 = vrot.slane %v968, 4
        %v970 = vadd.f32 %v968, %v969
        %v971 = vrot.slane %v970, 2
        %v972 = vadd.f32 %v970, %v971
        %v973 = vrot.slane %v972, 1
        %v974 = vadd.f32 %v972, %v973
        %v975 = vadd.f32 %v974, 0.0
        %v976 = vmul.f32 %v933, %v849
        %v977 = vmul.f32 %v934, %v850
        %v978 = vmul.f32 %v935, %v851
        %v979 = vmul.f32 %v936, %v852
        %v980 = vmul.f32 %v937, %v853
        %v981 = vmul.f32 %v938, %v854
        %v982 = vmul.f32 %v939, %v855
        %v983 = vmul.f32 %v940, %v856
        %v984 = vmul.f32 %v941, %v857
        %v985 = vmul.f32 %v942, %v858
        %v986 = vmul.f32 %v943, %v859
        %v987 = vmul.f32 %v944, %v860
        %v988 = vsel %vm313, %v976, 0.0
        %v989 = vsel %vm313, %v977, 0.0
        %v990 = vadd.f32 %v988, %v989
        %v991 = vsel %vm313, %v978, 0.0
        %v992 = vadd.f32 %v990, %v991
        %v993 = vsel %vm313, %v979, 0.0
        %v994 = vadd.f32 %v992, %v993
        %v995 = vsel %vm313, %v980, 0.0
        %v996 = vadd.f32 %v994, %v995
        %v997 = vsel %vm313, %v981, 0.0
        %v998 = vadd.f32 %v996, %v997
        %v999 = vsel %vm313, %v982, 0.0
        %v1000 = vadd.f32 %v998, %v999
        %v1001 = vsel %vm313, %v983, 0.0
        %v1002 = vadd.f32 %v1000, %v1001
        %v1003 = vsel %vm313, %v984, 0.0
        %v1004 = vadd.f32 %v1002, %v1003
        %v1005 = vsel %vm313, %v985, 0.0
        %v1006 = vadd.f32 %v1004, %v1005
        %v1007 = vsel %vm313, %v986, 0.0
        %v1008 = vadd.f32 %v1006, %v1007
        %v1009 = vsel %vm966, %v987, 0.0
        %v1010 = vadd.f32 %v1008, %v1009
        %v1011 = vrot.slane %v1010, 4
        %v1012 = vadd.f32 %v1010, %v1011
        %v1013 = vrot.slane %v1012, 2
        %v1014 = vadd.f32 %v1012, %v1013
        %v1015 = vrot.slane %v1014, 1
        %v1016 = vadd.f32 %v1014, %v1015
        %v1017 = vadd.f32 %v1016, 0.0
        %1018 = vset.pattern.permute.xlu0 1
        %1019 = vperm.xlu0 %1018, %v861
        %v1020 = vpop.permute.xlu0 %1019
        %1022 = vset.pattern.permute.xlu0 1
        %1023 = vperm.xlu0 %1022, %v862
        %v1024 = vpop.permute.xlu0 %1023
        %1026 = vset.pattern.permute.xlu0 1
        %1027 = vperm.xlu0 %1026, %v863
        %v1028 = vpop.permute.xlu0 %1027
        %1030 = vset.pattern.permute.xlu0 1
        %1031 = vperm.xlu0 %1030, %v864
        %v1032 = vpop.permute.xlu0 %1031
        %1034 = vset.pattern.permute.xlu0 1
        %1035 = vperm.xlu0 %1034, %v865
        %v1036 = vpop.permute.xlu0 %1035
        %1038 = vset.pattern.permute.xlu0 1
        %1039 = vperm.xlu0 %1038, %v866
        %v1040 = vpop.permute.xlu0 %1039
        %1042 = vset.pattern.permute.xlu0 1
        %1043 = vperm.xlu0 %1042, %v867
        %v1044 = vpop.permute.xlu0 %1043
        %1046 = vset.pattern.permute.xlu0 1
        %1047 = vperm.xlu0 %1046, %v868
        %v1048 = vpop.permute.xlu0 %1047
        %1050 = vset.pattern.permute.xlu0 1
        %1051 = vperm.xlu0 %1050, %v869
        %v1052 = vpop.permute.xlu0 %1051
        %1054 = vset.pattern.permute.xlu0 1
        %1055 = vperm.xlu0 %1054, %v870
        %v1056 = vpop.permute.xlu0 %1055
        %1058 = vset.pattern.permute.xlu0 1
        %1059 = vperm.xlu0 %1058, %v871
        %v1060 = vpop.permute.xlu0 %1059
        %1062 = vset.pattern.permute.xlu0 1
        %1063 = vperm.xlu0 %1062, %v872
        %v1064 = vpop.permute.xlu0 %1063
        %v1066 = vmul.f32 %v849, %v1020
        %v1067 = vmul.f32 %v850, %v1024
        %v1068 = vmul.f32 %v851, %v1028
        %v1069 = vmul.f32 %v852, %v1032
        %v1070 = vmul.f32 %v853, %v1036
        %v1071 = vmul.f32 %v854, %v1040
        %v1072 = vmul.f32 %v855, %v1044
        %v1073 = vmul.f32 %v856, %v1048
        %v1074 = vmul.f32 %v857, %v1052
        %v1075 = vmul.f32 %v858, %v1056
        %v1076 = vmul.f32 %v859, %v1060
        %v1077 = vmul.f32 %v860, %v1064
        %vm1078 = vcmask 64544
        %v1079 = vsel %vm1078, %v1066, 0.0
        %v1080 = vsel %vm1078, %v1067, 0.0
        %v1081 = vadd.f32 %v1079, %v1080
        %v1082 = vsel %vm1078, %v1068, 0.0
        %v1083 = vadd.f32 %v1081, %v1082
        %v1084 = vsel %vm1078, %v1069, 0.0
        %v1085 = vadd.f32 %v1083, %v1084
        %v1086 = vsel %vm1078, %v1070, 0.0
        %v1087 = vadd.f32 %v1085, %v1086
        %v1088 = vsel %vm1078, %v1071, 0.0
        %v1089 = vadd.f32 %v1087, %v1088
        %v1090 = vsel %vm1078, %v1072, 0.0
        %v1091 = vadd.f32 %v1089, %v1090
        %v1092 = vsel %vm1078, %v1073, 0.0
        %v1093 = vadd.f32 %v1091, %v1092
        %v1094 = vsel %vm1078, %v1074, 0.0
        %v1095 = vadd.f32 %v1093, %v1094
        %v1096 = vsel %vm1078, %v1075, 0.0
        %v1097 = vadd.f32 %v1095, %v1096
        %v1098 = vsel %vm1078, %v1076, 0.0
        %v1099 = vadd.f32 %v1097, %v1098
        %vm1100 = vcmask 58400
        %v1101 = vsel %vm1100, %v1077, 0.0
        %v1102 = vadd.f32 %v1099, %v1101
        %v1103 = vrot.slane %v1102, 4
        %v1104 = vadd.f32 %v1102, %v1103
        %v1105 = vrot.slane %v1104, 2
        %v1106 = vadd.f32 %v1104, %v1105
        %v1107 = vrot.slane %v1106, 1
        %v1108 = vadd.f32 %v1106, %v1107
        %1110 = vrot.lane.b32.xlu0 %v1108, 124
        %v1111 = vpop.permute.xlu0 %1110
        %v1113 = vadd.f32 %v975, %v1111
        %v1114 = vmul.f32 %v1066, %v849
        %v1115 = vmul.f32 %v1067, %v850
        %v1116 = vmul.f32 %v1068, %v851
        %v1117 = vmul.f32 %v1069, %v852
        %v1118 = vmul.f32 %v1070, %v853
        %v1119 = vmul.f32 %v1071, %v854
        %v1120 = vmul.f32 %v1072, %v855
        %v1121 = vmul.f32 %v1073, %v856
        %v1122 = vmul.f32 %v1074, %v857
        %v1123 = vmul.f32 %v1075, %v858
        %v1124 = vmul.f32 %v1076, %v859
        %v1125 = vmul.f32 %v1077, %v860
        %v1126 = vsel %vm1078, %v1114, 0.0
        %v1127 = vsel %vm1078, %v1115, 0.0
        %v1128 = vadd.f32 %v1126, %v1127
        %v1129 = vsel %vm1078, %v1116, 0.0
        %v1130 = vadd.f32 %v1128, %v1129
        %v1131 = vsel %vm1078, %v1117, 0.0
        %v1132 = vadd.f32 %v1130, %v1131
        %v1133 = vsel %vm1078, %v1118, 0.0
        %v1134 = vadd.f32 %v1132, %v1133
        %v1135 = vsel %vm1078, %v1119, 0.0
        %v1136 = vadd.f32 %v1134, %v1135
        %v1137 = vsel %vm1078, %v1120, 0.0
        %v1138 = vadd.f32 %v1136, %v1137
        %v1139 = vsel %vm1078, %v1121, 0.0
        %v1140 = vadd.f32 %v1138, %v1139
        %v1141 = vsel %vm1078, %v1122, 0.0
        %v1142 = vadd.f32 %v1140, %v1141
        %v1143 = vsel %vm1078, %v1123, 0.0
        %v1144 = vadd.f32 %v1142, %v1143
        %v1145 = vsel %vm1078, %v1124, 0.0
        %v1146 = vadd.f32 %v1144, %v1145
        %v1147 = vsel %vm1100, %v1125, 0.0
        %v1148 = vadd.f32 %v1146, %v1147
        %v1149 = vrot.slane %v1148, 4
        %v1150 = vadd.f32 %v1148, %v1149
        %v1151 = vrot.slane %v1150, 2
        %v1152 = vadd.f32 %v1150, %v1151
        %v1153 = vrot.slane %v1152, 1
        %v1154 = vadd.f32 %v1152, %v1153
        %1156 = vrot.lane.b32.xlu0 %v1154, 124
        %v1157 = vpop.permute.xlu0 %1156
        %v1159 = vadd.f32 %v1017, %v1157
        %1160 = vset.pattern.permute.xlu0 2
        %1161 = vperm.xlu0 %1160, %v861
        %v1162 = vpop.permute.xlu0 %1161
        %1164 = vset.pattern.permute.xlu0 2
        %1165 = vperm.xlu0 %1164, %v862
        %v1166 = vpop.permute.xlu0 %1165
        %1168 = vset.pattern.permute.xlu0 2
        %1169 = vperm.xlu0 %1168, %v863
        %v1170 = vpop.permute.xlu0 %1169
        %1172 = vset.pattern.permute.xlu0 2
        %1173 = vperm.xlu0 %1172, %v864
        %v1174 = vpop.permute.xlu0 %1173
        %1176 = vset.pattern.permute.xlu0 2
        %1177 = vperm.xlu0 %1176, %v865
        %v1178 = vpop.permute.xlu0 %1177
        %1180 = vset.pattern.permute.xlu0 2
        %1181 = vperm.xlu0 %1180, %v866
        %v1182 = vpop.permute.xlu0 %1181
        %1184 = vset.pattern.permute.xlu0 2
        %1185 = vperm.xlu0 %1184, %v867
        %v1186 = vpop.permute.xlu0 %1185
        %1188 = vset.pattern.permute.xlu0 2
        %1189 = vperm.xlu0 %1188, %v868
        %v1190 = vpop.permute.xlu0 %1189
        %1192 = vset.pattern.permute.xlu0 2
        %1193 = vperm.xlu0 %1192, %v869
        %v1194 = vpop.permute.xlu0 %1193
        %1196 = vset.pattern.permute.xlu0 2
        %1197 = vperm.xlu0 %1196, %v870
        %v1198 = vpop.permute.xlu0 %1197
        %1200 = vset.pattern.permute.xlu0 2
        %1201 = vperm.xlu0 %1200, %v871
        %v1202 = vpop.permute.xlu0 %1201
        %1204 = vset.pattern.permute.xlu0 2
        %1205 = vperm.xlu0 %1204, %v872
        %v1206 = vpop.permute.xlu0 %1205
        %v1208 = vmul.f32 %v849, %v1162
        %v1209 = vmul.f32 %v850, %v1166
        %v1210 = vmul.f32 %v851, %v1170
        %v1211 = vmul.f32 %v852, %v1174
        %v1212 = vmul.f32 %v853, %v1178
        %v1213 = vmul.f32 %v854, %v1182
        %v1214 = vmul.f32 %v855, %v1186
        %v1215 = vmul.f32 %v856, %v1190
        %v1216 = vmul.f32 %v857, %v1194
        %v1217 = vmul.f32 %v858, %v1198
        %v1218 = vmul.f32 %v859, %v1202
        %v1219 = vmul.f32 %v860, %v1206
        %vm1220 = vcmask 97344
        %v1221 = vsel %vm1220, %v1208, 0.0
        %v1222 = vsel %vm1220, %v1209, 0.0
        %v1223 = vadd.f32 %v1221, %v1222
        %v1224 = vsel %vm1220, %v1210, 0.0
        %v1225 = vadd.f32 %v1223, %v1224
        %v1226 = vsel %vm1220, %v1211, 0.0
        %v1227 = vadd.f32 %v1225, %v1226
        %v1228 = vsel %vm1220, %v1212, 0.0
        %v1229 = vadd.f32 %v1227, %v1228
        %v1230 = vsel %vm1220, %v1213, 0.0
        %v1231 = vadd.f32 %v1229, %v1230
        %v1232 = vsel %vm1220, %v1214, 0.0
        %v1233 = vadd.f32 %v1231, %v1232
        %v1234 = vsel %vm1220, %v1215, 0.0
        %v1235 = vadd.f32 %v1233, %v1234
        %v1236 = vsel %vm1220, %v1216, 0.0
        %v1237 = vadd.f32 %v1235, %v1236
        %v1238 = vsel %vm1220, %v1217, 0.0
        %v1239 = vadd.f32 %v1237, %v1238
        %v1240 = vsel %vm1220, %v1218, 0.0
        %v1241 = vadd.f32 %v1239, %v1240
        %vm1242 = vcmask 91200
        %v1243 = vsel %vm1242, %v1219, 0.0
        %v1244 = vadd.f32 %v1241, %v1243
        %v1245 = vrot.slane %v1244, 4
        %v1246 = vadd.f32 %v1244, %v1245
        %v1247 = vrot.slane %v1246, 2
        %v1248 = vadd.f32 %v1246, %v1247
        %v1249 = vrot.slane %v1248, 1
        %v1250 = vadd.f32 %v1248, %v1249
        %1252 = vrot.lane.b32.xlu0 %v1250, 120
        %v1253 = vpop.permute.xlu0 %1252
        %v1255 = vadd.f32 %v1113, %v1253
        %v1256 = vmul.f32 %v1208, %v849
        %v1257 = vmul.f32 %v1209, %v850
        %v1258 = vmul.f32 %v1210, %v851
        %v1259 = vmul.f32 %v1211, %v852
        %v1260 = vmul.f32 %v1212, %v853
        %v1261 = vmul.f32 %v1213, %v854
        %v1262 = vmul.f32 %v1214, %v855
        %v1263 = vmul.f32 %v1215, %v856
        %v1264 = vmul.f32 %v1216, %v857
        %v1265 = vmul.f32 %v1217, %v858
        %v1266 = vmul.f32 %v1218, %v859
        %v1267 = vmul.f32 %v1219, %v860
        %v1268 = vsel %vm1220, %v1256, 0.0
        %v1269 = vsel %vm1220, %v1257, 0.0
        %v1270 = vadd.f32 %v1268, %v1269
        %v1271 = vsel %vm1220, %v1258, 0.0
        %v1272 = vadd.f32 %v1270, %v1271
        %v1273 = vsel %vm1220, %v1259, 0.0
        %v1274 = vadd.f32 %v1272, %v1273
        %v1275 = vsel %vm1220, %v1260, 0.0
        %v1276 = vadd.f32 %v1274, %v1275
        %v1277 = vsel %vm1220, %v1261, 0.0
        %v1278 = vadd.f32 %v1276, %v1277
        %v1279 = vsel %vm1220, %v1262, 0.0
        %v1280 = vadd.f32 %v1278, %v1279
        %v1281 = vsel %vm1220, %v1263, 0.0
        %v1282 = vadd.f32 %v1280, %v1281
        %v1283 = vsel %vm1220, %v1264, 0.0
        %v1284 = vadd.f32 %v1282, %v1283
        %v1285 = vsel %vm1220, %v1265, 0.0
        %v1286 = vadd.f32 %v1284, %v1285
        %v1287 = vsel %vm1220, %v1266, 0.0
        %v1288 = vadd.f32 %v1286, %v1287
        %v1289 = vsel %vm1242, %v1267, 0.0
        %v1290 = vadd.f32 %v1288, %v1289
        %v1291 = vrot.slane %v1290, 4
        %v1292 = vadd.f32 %v1290, %v1291
        %v1293 = vrot.slane %v1292, 2
        %v1294 = vadd.f32 %v1292, %v1293
        %v1295 = vrot.slane %v1294, 1
        %v1296 = vadd.f32 %v1294, %v1295
        %1298 = vrot.lane.b32.xlu0 %v1296, 120
        %v1299 = vpop.permute.xlu0 %1298
        %v1301 = vadd.f32 %v1159, %v1299
        %1302 = vset.pattern.permute.xlu0 3
        %1303 = vperm.xlu0 %1302, %v861
        %v1304 = vpop.permute.xlu0 %1303
        %1306 = vset.pattern.permute.xlu0 3
        %1307 = vperm.xlu0 %1306, %v862
        %v1308 = vpop.permute.xlu0 %1307
        %1310 = vset.pattern.permute.xlu0 3
        %1311 = vperm.xlu0 %1310, %v863
        %v1312 = vpop.permute.xlu0 %1311
        %1314 = vset.pattern.permute.xlu0 3
        %1315 = vperm.xlu0 %1314, %v864
        %v1316 = vpop.permute.xlu0 %1315
        %1318 = vset.pattern.permute.xlu0 3
        %1319 = vperm.xlu0 %1318, %v865
        %v1320 = vpop.permute.xlu0 %1319
        %1322 = vset.pattern.permute.xlu0 3
        %1323 = vperm.xlu0 %1322, %v866
        %v1324 = vpop.permute.xlu0 %1323
        %1326 = vset.pattern.permute.xlu0 3
        %1327 = vperm.xlu0 %1326, %v867
        %v1328 = vpop.permute.xlu0 %1327
        %1330 = vset.pattern.permute.xlu0 3
        %1331 = vperm.xlu0 %1330, %v868
        %v1332 = vpop.permute.xlu0 %1331
        %1334 = vset.pattern.permute.xlu0 3
        %1335 = vperm.xlu0 %1334, %v869
        %v1336 = vpop.permute.xlu0 %1335
        %1338 = vset.pattern.permute.xlu0 3
        %1339 = vperm.xlu0 %1338, %v870
        %v1340 = vpop.permute.xlu0 %1339
        %1342 = vset.pattern.permute.xlu0 3
        %1343 = vperm.xlu0 %1342, %v871
        %v1344 = vpop.permute.xlu0 %1343
        %1346 = vset.pattern.permute.xlu0 3
        %1347 = vperm.xlu0 %1346, %v872
        %v1348 = vpop.permute.xlu0 %1347
        %v1350 = vmul.f32 %v849, %v1304
        %v1351 = vmul.f32 %v850, %v1308
        %v1352 = vmul.f32 %v851, %v1312
        %v1353 = vmul.f32 %v852, %v1316
        %v1354 = vmul.f32 %v853, %v1320
        %v1355 = vmul.f32 %v854, %v1324
        %v1356 = vmul.f32 %v855, %v1328
        %v1357 = vmul.f32 %v856, %v1332
        %v1358 = vmul.f32 %v857, %v1336
        %v1359 = vmul.f32 %v858, %v1340
        %v1360 = vmul.f32 %v859, %v1344
        %v1361 = vmul.f32 %v860, %v1348
        %vm1362 = vcmask 130144
        %v1363 = vsel %vm1362, %v1350, 0.0
        %v1364 = vsel %vm1362, %v1351, 0.0
        %v1365 = vadd.f32 %v1363, %v1364
        %v1366 = vsel %vm1362, %v1352, 0.0
        %v1367 = vadd.f32 %v1365, %v1366
        %v1368 = vsel %vm1362, %v1353, 0.0
        %v1369 = vadd.f32 %v1367, %v1368
        %v1370 = vsel %vm1362, %v1354, 0.0
        %v1371 = vadd.f32 %v1369, %v1370
        %v1372 = vsel %vm1362, %v1355, 0.0
        %v1373 = vadd.f32 %v1371, %v1372
        %v1374 = vsel %vm1362, %v1356, 0.0
        %v1375 = vadd.f32 %v1373, %v1374
        %v1376 = vsel %vm1362, %v1357, 0.0
        %v1377 = vadd.f32 %v1375, %v1376
        %v1378 = vsel %vm1362, %v1358, 0.0
        %v1379 = vadd.f32 %v1377, %v1378
        %v1380 = vsel %vm1362, %v1359, 0.0
        %v1381 = vadd.f32 %v1379, %v1380
        %v1382 = vsel %vm1362, %v1360, 0.0
        %v1383 = vadd.f32 %v1381, %v1382
        %vm1384 = vcmask 124000
        %v1385 = vsel %vm1384, %v1361, 0.0
        %v1386 = vadd.f32 %v1383, %v1385
        %v1387 = vrot.slane %v1386, 4
        %v1388 = vadd.f32 %v1386, %v1387
        %v1389 = vrot.slane %v1388, 2
        %v1390 = vadd.f32 %v1388, %v1389
        %v1391 = vrot.slane %v1390, 1
        %v1392 = vadd.f32 %v1390, %v1391
        %1394 = vrot.lane.b32.xlu0 %v1392, 116
        %v1395 = vpop.permute.xlu0 %1394
        %v1397 = vadd.f32 %v1255, %v1395
        %v1398 = vmul.f32 %v1350, %v849
        %v1399 = vmul.f32 %v1351, %v850
        %v1400 = vmul.f32 %v1352, %v851
        %v1401 = vmul.f32 %v1353, %v852
        %v1402 = vmul.f32 %v1354, %v853
        %v1403 = vmul.f32 %v1355, %v854
        %v1404 = vmul.f32 %v1356, %v855
        %v1405 = vmul.f32 %v1357, %v856
        %v1406 = vmul.f32 %v1358, %v857
        %v1407 = vmul.f32 %v1359, %v858
        %v1408 = vmul.f32 %v1360, %v859
        %v1409 = vmul.f32 %v1361, %v860
        %v1410 = vsel %vm1362, %v1398, 0.0
        %v1411 = vsel %vm1362, %v1399, 0.0
        %v1412 = vadd.f32 %v1410, %v1411
        %v1413 = vsel %vm1362, %v1400, 0.0
        %v1414 = vadd.f32 %v1412, %v1413
        %v1415 = vsel %vm1362, %v1401, 0.0
        %v1416 = vadd.f32 %v1414, %v1415
        %v1417 = vsel %vm1362, %v1402, 0.0
        %v1418 = vadd.f32 %v1416, %v1417
        %v1419 = vsel %vm1362, %v1403, 0.0
        %v1420 = vadd.f32 %v1418, %v1419
        %v1421 = vsel %vm1362, %v1404, 0.0
        %v1422 = vadd.f32 %v1420, %v1421
        %v1423 = vsel %vm1362, %v1405, 0.0
        %v1424 = vadd.f32 %v1422, %v1423
        %v1425 = vsel %vm1362, %v1406, 0.0
        %v1426 = vadd.f32 %v1424, %v1425
        %v1427 = vsel %vm1362, %v1407, 0.0
        %v1428 = vadd.f32 %v1426, %v1427
        %v1429 = vsel %vm1362, %v1408, 0.0
        %v1430 = vadd.f32 %v1428, %v1429
        %v1431 = vsel %vm1384, %v1409, 0.0
        %v1432 = vadd.f32 %v1430, %v1431
        %v1433 = vrot.slane %v1432, 4
        %v1434 = vadd.f32 %v1432, %v1433
        %v1435 = vrot.slane %v1434, 2
        %v1436 = vadd.f32 %v1434, %v1435
        %v1437 = vrot.slane %v1436, 1
        %v1438 = vadd.f32 %v1436, %v1437
        %1440 = vrot.lane.b32.xlu0 %v1438, 116
        %v1441 = vpop.permute.xlu0 %1440
        %v1443 = vadd.f32 %v1301, %v1441
        %v1444 = vmul.f32 %v1397, 0.00390625
        %v1445 = vmul.f32 %v1443, 0.00390625
        %v1446 = vmul.f32 %v1444, %v1444
        %v1447 = vsub.f32 %v1445, %v1446
        %v1448 = vadd.f32 %v1447, 1e-05
        %v1449 = vrsqrt.pop %v1448
        %1451 = vrot.lane.b32.xlu0 %v1449, 4
        %v1452 = vpop.permute.xlu0 %1451
        %1454 = vrot.lane.b32.xlu0 %v1449, 8
        %v1455 = vpop.permute.xlu0 %1454
        %1457 = vrot.lane.b32.xlu0 %v1449, 12
        %v1458 = vpop.permute.xlu0 %1457
        %v1460 = vsel %vm313, %v1449, %v1452
        %vm1461 = vcmask 64512
        %v1462 = vsel %vm1461, %v1460, %v1455
        %vm1463 = vcmask 97280
        %v1464 = vsel %vm1463, %v1462, %v1458
        %1466 = vrot.lane.b32.xlu0 %v1444, 4
        %v1467 = vpop.permute.xlu0 %1466
        %1469 = vrot.lane.b32.xlu0 %v1444, 8
        %v1470 = vpop.permute.xlu0 %1469
        %1472 = vrot.lane.b32.xlu0 %v1444, 12
        %v1473 = vpop.permute.xlu0 %1472
        %v1475 = vsel %vm313, %v1444, %v1467
        %v1476 = vsel %vm1461, %v1475, %v1470
        %v1477 = vsel %vm1463, %v1476, %v1473
        %v1478 = vlaneseq
        %v1479 = vshrl.u32 %v1478, 7
        %v1480 = vsub.s32 0, %v1479
        %v1481 = vrot.slane %v1477, %v1480
        %v1482 = vsub.f32 %v849, %v1481
        %v1483 = vsub.f32 %v850, %v1481
        %v1484 = vsub.f32 %v851, %v1481
        %v1485 = vsub.f32 %v852, %v1481
        %v1486 = vsub.f32 %v853, %v1481
        %v1487 = vsub.f32 %v854, %v1481
        %v1488 = vsub.f32 %v855, %v1481
        %v1489 = vsub.f32 %v856, %v1481
        %v1490 = vsub.f32 %v857, %v1481
        %v1491 = vsub.f32 %v858, %v1481
        %v1492 = vsub.f32 %v859, %v1481
        %v1493 = vsub.f32 %v860, %v1481
        %v1494 = vlaneseq
        %v1495 = vshrl.u32 %v1494, 7
        %v1496 = vsub.s32 0, %v1495
        %v1497 = vrot.slane %v1464, %v1496
        %v1498 = vmul.f32 %v1482, %v1497
        %v1499 = vmul.f32 %v1483, %v1497
        %v1500 = vmul.f32 %v1484, %v1497
        %v1501 = vmul.f32 %v1485, %v1497
        %v1502 = vmul.f32 %v1486, %v1497
        %v1503 = vmul.f32 %v1487, %v1497
        %v1504 = vmul.f32 %v1488, %v1497
        %v1505 = vmul.f32 %v1489, %v1497
        %v1506 = vmul.f32 %v1490, %v1497
        %v1507 = vmul.f32 %v1491, %v1497
        %v1508 = vmul.f32 %v1492, %v1497
        %v1509 = vmul.f32 %v1493, %v1497
        %v1510 = vmax.f32 %v1498, 0.0
        %v1511 = vmax.f32 %v1499, 0.0
        %v1512 = vmax.f32 %v1500, 0.0
        %v1513 = vmax.f32 %v1501, 0.0
        %v1514 = vmax.f32 %v1502, 0.0
        %v1515 = vmax.f32 %v1503, 0.0
        %v1516 = vmax.f32 %v1504, 0.0
        %v1517 = vmax.f32 %v1505, 0.0
        %v1518 = vmax.f32 %v1506, 0.0
        %v1519 = vmax.f32 %v1507, 0.0
        %v1520 = vmax.f32 %v1508, 0.0
        %v1521 = vmax.f32 %v1509, 0.0
        %vm1522 = vcmask 130048
        %1523 = vst.msk [vmem:[%s217] sm:$0xff] %vm1522, %v1510
        %1524 = vst.msk [vmem:[%s217 + $0x8] sm:$0xff] %vm1522, %v1511
        %1525 = vst.msk [vmem:[%s217 + $0x10] sm:$0xff] %vm1522, %v1512
        %1526 = vst.msk [vmem:[%s217 + $0x18] sm:$0xff] %vm1522, %v1513
        %1527 = vst.msk [vmem:[%s217 + $0x20] sm:$0xff] %vm1522, %v1514
        %1528 = vst.msk [vmem:[%s217 + $0x28] sm:$0xff] %vm1522, %v1515
        %1529 = vst.msk [vmem:[%s217 + $0x30] sm:$0xff] %vm1522, %v1516
        %1530 = vst.msk [vmem:[%s217 + $0x38] sm:$0xff] %vm1522, %v1517
        %1531 = vst.msk [vmem:[%s217 + $0x40] sm:$0xff] %vm1522, %v1518
        %1532 = vst.msk [vmem:[%s217 + $0x48] sm:$0xff] %vm1522, %v1519
        %1533 = vst.msk [vmem:[%s217 + $0x50] sm:$0xff] %vm1522, %v1520
        %vm1534 = vcmask 123904
        %1535 = vst.msk [vmem:[%s217 + $0x58] sm:$0x3] %vm1534, %v1521
        %s1536 = sand.u32 %s97, 1
        %s1537 = scalar_lea.sflag [#allocation4], %s1536
        %s1538 = sand.u32 %s97, 1
        %s1539 = smul.addr %s1538, 96
        %s1540 = scalar_lea.vmem [#allocation8], %s1539
        // Predicated region
        $region45: #{tpu_custom_call.1} parent=31 // pred_check
          %p1541 = pneg %p107
        $region46: #{tpu_custom_call.1} parent=31 // pred_check_branch
          %1543 = sbr.rel (%p1541) target = $region48
        $region47: #{tpu_custom_call.1} parent=31 // pred_region
          %s1545 = ssub.s32 1536, 1536
          %1546 = vsyncadd %s1537, %s1545
          %s1547 = smul.addr %s21, 12
          %s1548 = smul.addr %s1547, 128
          %s1549 = scalar_lea.hbm %s3, %s1548
          %s1550 = sshll.u32 %s1540, 4
          %s1551 = int_to_ptr.vmem [resolvable:$true] %s1550
          %1556 = dma.vmem_to_hbm [thread:$0]  %s1551, 1536, %s1549, %s1537, 128, 128, 8
        $region48: #{tpu_custom_call.1} parent=31 // pred_fallthru
          _
      $region32: #{tpu_custom_call.1} parent=5 // pred_fallthru
        _
      %p1557 = scmp.le.s32.totalorder 2, %s16
      // Predicated region
      $region49: #{tpu_custom_call.1} parent=5 // pred_check
        %p1558 = pneg %p1557
      $region50: #{tpu_custom_call.1} parent=5 // pred_check_branch
        %1560 = sbr.rel (%p1558) target = $region52
      $region51: #{tpu_custom_call.1} parent=5 // pred_region
        %s1561 = ssub.s32 %s16, 2
        // Predicated region
        $region53: #{tpu_custom_call.1} parent=51 // pred_check
          %p1562 = pneg %p113
        $region54: #{tpu_custom_call.1} parent=51 // pred_check_branch
          %1564 = sbr.rel (%p1562) target = $region56
        $region55: #{tpu_custom_call.1} parent=51 // pred_region
          %s1565 = sand.u32 %s98, 1
          %s1566 = scalar_lea.sflag [#allocation4], %s1565
          %s1567 = sand.u32 %s98, 1
          %s1568 = smul.addr %s1567, 96
          %s1569 = scalar_lea.vmem [#allocation8], %s1568
          %1570 = dma.done %s1566, 1536
        $region56: #{tpu_custom_call.1} parent=51 // pred_fallthru
          _
      $region52: #{tpu_custom_call.1} parent=5 // pred_fallthru
        _
    $region6: #{tpu_custom_call.1} parent=1 // loop_footer
      %s20 = sadd.s32 1, %s16
    $region7: #{tpu_custom_call.1} parent=1 // loop_footer_branch
      %15 = sbr.rel target = $region3
    $region8: #{tpu_custom_call.1} parent=1 // loop_exit
      _
    %1571 = vsyncpa [#allocation3], 1
    %s1572 = scalar_lea.sflag [#allocation3], 1
    %1573 = vsyncpa %s1572, 1
    %1574 = vsyncpa [#allocation6], 1
    %1575 = vsyncpa [#allocation4], 1
    %s1576 = scalar_lea.sflag [#allocation4], 1
    %1577 = vsyncpa %s1576, 1

</llo_original>
